<compile_context>
chip_gen: v6e
topology: v6e:2x2x1
jax: 0.10.0
libtpu: 0.0.40
codegen_flags: <defaults>
</compile_context>

<pallas_src>
import jax
import jax.numpy as jnp
from jax.experimental import pallas as pl
from jax.experimental.pallas import tpu as pltpu

_VMEM = pl.BlockSpec(memory_space=pltpu.MemorySpace.VMEM)
_SMEM = pl.BlockSpec(memory_space=pltpu.MemorySpace.SMEM)


# ------------------------------ forward pass --------------------------------

def lesicin_forward(params,
                    input_ids, attention_mask, labels,
                    node_input_ids, edge_input_ids,
                    sec_input_ids, sec_attention_mask,
                    sec_node_input_ids, sec_edge_input_ids,
                    lambdas=(0.5, 0.5), thetas=(3, 2, 3), num_mpaths=8):
    """Returns (loss, scores) with the semantics of the torch module forward."""
    # repeat(num_mpaths) + mean over identical copies in the synthetic graph
    # encoder is the identity, so it is not materialized.
    del num_mpaths

    p = params
    f32, bf16 = jnp.float32, jnp.bfloat16

    B, S = input_ids.shape
    L = sec_input_ids.shape[0]
    NN = node_input_ids.shape[1]
    NE = edge_input_ids.shape[1]
    H = p["pool_w"].shape[0]
    V = p["tok_emb"].shape[0]
    VN = p["node_emb"].shape[0]
    VE = p["edge_emb"].shape[0]

    # ---- wrapper-side algebra (free, outside the kernel) --------------------
    # Fold intra/inter context Linears into the graph-encoder weights
    # (dropout == identity in eval mode):
    #   intra@Wgi + inter@Wgx = attr @ (Wi@Wgi + Wx@Wgx) + (bi@Wgi + bx@Wgx)
    gcomb_w = p["intra_w"] @ p["g_wi"] + p["inter_w"] @ p["g_wx"]          # (H, H)
    gcomb_b = p["intra_b"] @ p["g_wi"] + p["inter_b"] @ p["g_wx"] + p["g_b"]
    # Fold match_context_transform into the match projection:
    #   (x + x@Wc + bc) @ Wm = x @ (Wm + Wc@Wm) + bc@Wm
    qm_w = p["m_w"] + p["mctx_w"] @ p["m_w"]                               # (H, H)
    qm_b = p["mctx_b"] @ p["m_w"]                                          # (H,)

    # ---- pad per-row id lists so in-kernel reshapes are tile aligned --------
    def pad8(x, fill):
        n = x.shape[1]
        npad = (-n) % 8
        if npad:
            x = jnp.concatenate(
                [x, jnp.full((x.shape[0], npad), fill, x.dtype)], axis=1)
        return x, n + npad

    ii_p, SP = pad8(input_ids.astype(jnp.int32), V)      # pad id == V -> zero one-hot
    sii_p, _ = pad8(sec_input_ids.astype(jnp.int32), V)
    am_p, _ = pad8(attention_mask.astype(f32), 0.0)
    sam_p, _ = pad8(sec_attention_mask.astype(f32), 0.0)
    ni_p, NNP = pad8(node_input_ids.astype(jnp.int32), VN)
    ei_p, NEP = pad8(edge_input_ids.astype(jnp.int32), VE)
    sni_p, _ = pad8(sec_node_input_ids.astype(jnp.int32), VN)
    sei_p, _ = pad8(sec_edge_input_ids.astype(jnp.int32), VE)

    # Exact masked-mean reciprocals (from the un-padded mask), computed once.
    fid = 1.0 / jnp.maximum(attention_mask.astype(f32).sum(axis=1, keepdims=True), 1.0)
    sid = 1.0 / jnp.maximum(sec_attention_mask.astype(f32).sum(axis=1, keepdims=True), 1.0)

    # Flatten id/mask arrays to (rows*len, 1) columns so in-kernel one-hot
    # construction stays 2-D; group reduction happens via reshape+sum in-kernel.
    ii = ii_p.reshape(B * SP, 1)
    am = am_p.reshape(B * SP, 1)
    sii = sii_p.reshape(L * SP, 1)
    sam = sam_p.reshape(L * SP, 1)
    ni = ni_p.reshape(B * NNP, 1)
    ei = ei_p.reshape(B * NEP, 1)
    sni = sni_p.reshape(L * NNP, 1)
    sei = sei_p.reshape(L * NEP, 1)
    y = labels.astype(f32)

    # ---- kernel --------------------------------------------------------------
    def kernel(ii_ref, am_ref, fid_ref, sii_ref, sam_ref, sid_ref,
               ni_ref, ei_ref, sni_ref, sei_ref, labels_ref,
               tok_ref, pw_ref, pb_ref,
               nemb_ref, eemb_ref, gwn_ref, gwe_ref, gcw_ref, gcb_ref,
               qmw_ref, qmb_ref, mb_ref,
               scores_ref, loss_ref):

        def mm(a, b_bf16):
            # bf16 MXU inputs, f32 accumulation.
            return jnp.dot(a.astype(bf16), b_bf16, preferred_element_type=f32)

        def onehot(ids_col, vocab):
            # (M, 1) int32 -> (M, vocab) bf16 one-hot; out-of-range ids (padding)
            # produce an all-zero row.
            vi = jax.lax.broadcasted_iota(jnp.int32, (ids_col.shape[0], vocab), 1)
            return jnp.where(ids_col == vi, 1.0, 0.0).astype(bf16)

        # weights (all VMEM-resident, bf16 matrices / f32 biases)
        tok_emb = tok_ref[...]
        pool_w, pool_b = pw_ref[...], pb_ref[...]
        node_emb, edge_emb = nemb_ref[...], eemb_ref[...]
        g_wn, g_we = gwn_ref[...], gwe_ref[...]
        gcomb_wk, gcomb_bk = gcw_ref[...], gcb_ref[...]
        qm_wk, qm_bk = qmw_ref[...], qmb_ref[...]
        m_b = mb_ref[...]

        # --- synthetic BERT-style text encoder: masked mean + tanh(Linear) ---
        def text_pool(ids_ref, mask_ref, invd_ref, rows):
            emb = jnp.dot(onehot(ids_ref[...], V), tok_emb,
                          preferred_element_type=f32)            # (rows*SP, H)
            emb = emb * mask_ref[...]                             # mask on (M, H)
            summed = jnp.sum(emb.reshape(rows, SP, H), axis=1)    # sublane reduce
            pooled = summed * invd_ref[...]                       # exact masked mean
            return jnp.tanh(mm(pooled, pool_w) + pool_b)          # (rows, H)

        # --- mean embedding lookup via one-hot MXU gather + sublane reduce ---
        def mean_emb(ids_ref, rows, per_row_pad, inv_count, table, vocab):
            emb = jnp.dot(onehot(ids_ref[...], vocab), table,
                          preferred_element_type=f32)             # (rows*pad, H)
            return jnp.sum(emb.reshape(rows, per_row_pad, H), axis=1) * inv_count

        # --- synthetic graph encoder: dot-accumulation, no concat ------------
        def graph_encode(node_ids_ref, edge_ids_ref, attr_hidden, rows):
            nm = mean_emb(node_ids_ref, rows, NNP, 1.0 / NN, node_emb, VN)
            em = mean_emb(edge_ids_ref, rows, NEP, 1.0 / NE, edge_emb, VE)
            acc = mm(nm, g_wn) + mm(em, g_we) + mm(attr_hidden, gcomb_wk) + gcomb_bk
            return jnp.tanh(acc)                                  # (rows, H)

        # --- synthetic match network: bilinear score + per-label bias --------
        def match_logits(qm, sec_hidden):
            return jax.lax.dot_general(
                qm.astype(bf16), sec_hidden.astype(bf16),
                (((1,), (1,)), ((), ())),
                preferred_element_type=f32) + m_b                 # (B, L)

        fact_attr = text_pool(ii_ref, am_ref, fid_ref, B)          # (B, H)
        sec_attr = text_pool(sii_ref, sam_ref, sid_ref, L)         # (L, H)

        qm_attr = mm(fact_attr, qm_wk) + qm_bk                     # folded mctx+match
        attr_logits = match_logits(qm_attr, sec_attr)              # (B, L)

        sec_struct = graph_encode(sni_ref, sei_ref, sec_attr, L)   # (L, H)
        align_logits = match_logits(qm_attr, sec_struct)           # (B, L)

        fact_struct = graph_encode(ni_ref, ei_ref, fact_attr, B)   # (B, H)
        qm_struct = mm(fact_struct, qm_wk) + qm_bk
        struct_logits = match_logits(qm_struct, sec_struct)        # (B, L)

        scores_ref[...] = (lambdas[0] * jax.nn.sigmoid(attr_logits)
                           + lambdas[-1] * jax.nn.sigmoid(align_logits))

        # --- fused BCEWithLogits (mean reduction) x3, theta-weighted ---------
        yb = labels_ref[...]

        def bce_mean(x):
            elt = jnp.maximum(x, 0.0) - x * yb + jnp.log1p(jnp.exp(-jnp.abs(x)))
            return jnp.mean(elt)

        loss = (thetas[0] * bce_mean(attr_logits)
                + thetas[1] * bce_mean(struct_logits)
                + thetas[2] * bce_mean(align_logits))
        loss_ref[0, 0] = loss                                      # scalar -> SMEM

    scores, loss = pl.pallas_call(
        kernel,
        out_shape=(jax.ShapeDtypeStruct((B, L), f32),
                   jax.ShapeDtypeStruct((1, 1), f32)),
        in_specs=[_VMEM] * 23,
        out_specs=(_VMEM, _SMEM),
    )(ii, am, fid, sii, sam, sid, ni, ei, sni, sei, y,
      p["tok_emb"].astype(bf16),
      p["pool_w"].astype(bf16), p["pool_b"].reshape(1, H).astype(f32),
      p["node_emb"].astype(bf16), p["edge_emb"].astype(bf16),
      p["g_wn"].astype(bf16), p["g_we"].astype(bf16),
      gcomb_w.astype(bf16), gcomb_b.reshape(1, H).astype(f32),
      qm_w.astype(bf16), qm_b.reshape(1, H).astype(f32),
      p["m_b"].reshape(1, L).astype(f32))

    return loss[0, 0], scores


# ------------------------------ parameters ----------------------------------

def init_params(key, hidden=32, vocab=64, node_vocab=32, edge_vocab=16, num_labels=4):
    ks = jax.random.split(key, 18)
    it = iter(ks)
    w = lambda shape: 0.02 * jax.random.normal(next(it), shape, jnp.float32)
    h2 = 2 * hidden
    return {
        # synthetic text encoder (embedding table + BERT-style pooler)
        "tok_emb": w((vocab, hidden)),
        "pool_w": w((hidden, hidden)),
        "pool_b": w((hidden,)),
        # synthetic graph encoder (node / edge / intra / inter projections)
        "node_emb": w((node_vocab, hidden)),
        "edge_emb": w((edge_vocab, hidden)),
        "g_wn": w((hidden, hidden)),
        "g_we": w((hidden, hidden)),
        "g_wi": w((h2, hidden)),
        "g_wx": w((h2, hidden)),
        "g_b": w((hidden,)),
        # synthetic match network (bilinear match + per-label bias)
        "m_w": w((hidden, hidden)),
        "m_b": w((num_labels,)),
        # module-owned linears
        "mctx_w": w((hidden, hidden)),
        "mctx_b": w((hidden,)),
        "intra_w": w((hidden, h2)),
        "intra_b": w((h2,)),
        "inter_w": w((hidden, h2)),
        "inter_b": w((h2,)),
    }


# --------------------------------- main --------------------------------------

if __name__ == "__main__":
    B, L, S, H = 2, 4, 8, 32
    V, VN, VE = 64, 32, 16
    NN, NE = 6, 5
    NUM_MPATHS = 8

    root = jax.random.PRNGKey(0)
    kp, k1, k2, k3, k4, k5, k6, k7 = jax.random.split(root, 8)

    params = init_params(kp, hidden=H, vocab=V, node_vocab=VN,
                         edge_vocab=VE, num_labels=L)

    input_ids = jax.random.randint(k1, (B, S), 0, V, dtype=jnp.int32)
    attention_mask = jnp.concatenate(
        [jnp.ones((B, S - 2), jnp.int32),
         jnp.array([[1, 1], [1, 0]], jnp.int32)], axis=1)
    labels = jax.random.bernoulli(k2, 0.5, (B, L)).astype(jnp.float32)
    node_input_ids = jax.random.randint(k3, (B, NN), 0, VN, dtype=jnp.int32)
    edge_input_ids = jax.random.randint(k4, (B, NE), 0, VE, dtype=jnp.int32)
    sec_input_ids = jax.random.randint(k5, (L, S), 0, V, dtype=jnp.int32)
    sec_attention_mask = jnp.ones((L, S), jnp.int32)
    sec_node_input_ids = jax.random.randint(k6, (L, NN), 0, VN, dtype=jnp.int32)
    sec_edge_input_ids = jax.random.randint(k7, (L, NE), 0, VE, dtype=jnp.int32)

    fwd = jax.jit(lesicin_forward,
                  static_argnames=("lambdas", "thetas", "num_mpaths"))
    loss, scores = fwd(params,
                       input_ids, attention_mask, labels,
                       node_input_ids, edge_input_ids,
                       sec_input_ids, sec_attention_mask,
                       sec_node_input_ids, sec_edge_input_ids,
                       lambdas=(0.5, 0.5), thetas=(3, 2, 3),
                       num_mpaths=NUM_MPATHS)

    jax.block_until_ready((loss, scores))
    assert scores.shape == (B, L)
    assert bool(jnp.isfinite(loss))
    assert bool(jnp.all(jnp.isfinite(scores)))
    print("KERNEL_OK")
</pallas_src>

<mosaic_0001>
module attributes {stable_mosaic.version = 11 : i64} {
  func.func @kernel(%arg0: memref<16x1xi32, #tpu.memory_space<vmem>>, %arg1: memref<16x1xf32, #tpu.memory_space<vmem>>, %arg2: memref<2x1xf32, #tpu.memory_space<vmem>>, %arg3: memref<32x1xi32, #tpu.memory_space<vmem>>, %arg4: memref<32x1xf32, #tpu.memory_space<vmem>>, %arg5: memref<4x1xf32, #tpu.memory_space<vmem>>, %arg6: memref<16x1xi32, #tpu.memory_space<vmem>>, %arg7: memref<16x1xi32, #tpu.memory_space<vmem>>, %arg8: memref<32x1xi32, #tpu.memory_space<vmem>>, %arg9: memref<32x1xi32, #tpu.memory_space<vmem>>, %arg10: memref<2x4xf32, #tpu.memory_space<vmem>>, %arg11: memref<64x32xbf16, #tpu.memory_space<vmem>>, %arg12: memref<32x32xbf16, #tpu.memory_space<vmem>>, %arg13: memref<1x32xf32, #tpu.memory_space<vmem>>, %arg14: memref<32x32xbf16, #tpu.memory_space<vmem>>, %arg15: memref<16x32xbf16, #tpu.memory_space<vmem>>, %arg16: memref<32x32xbf16, #tpu.memory_space<vmem>>, %arg17: memref<32x32xbf16, #tpu.memory_space<vmem>>, %arg18: memref<32x32xbf16, #tpu.memory_space<vmem>>, %arg19: memref<1x32xf32, #tpu.memory_space<vmem>>, %arg20: memref<32x32xbf16, #tpu.memory_space<vmem>>, %arg21: memref<1x32xf32, #tpu.memory_space<vmem>>, %arg22: memref<1x4xf32, #tpu.memory_space<vmem>>, %arg23: memref<2x4xf32, #tpu.memory_space<vmem>>, %arg24: memref<1x1xf32, #tpu.memory_space<smem>>) attributes {dimension_semantics = [], scalar_prefetch = 0 : i64, scratch_operands = 0 : i64, tpu.core_type = #tpu.core_type<tc>} {
    %c0 = arith.constant 0 : index
    %c0_0 = arith.constant 0 : index
    %0 = vector.load %arg11[%c0, %c0_0] : memref<64x32xbf16, #tpu.memory_space<vmem>>, vector<64x32xbf16>
    %c0_1 = arith.constant 0 : index
    %c0_2 = arith.constant 0 : index
    %1 = vector.load %arg12[%c0_1, %c0_2] : memref<32x32xbf16, #tpu.memory_space<vmem>>, vector<32x32xbf16>
    %c0_3 = arith.constant 0 : index
    %c0_4 = arith.constant 0 : index
    %2 = vector.load %arg13[%c0_3, %c0_4] : memref<1x32xf32, #tpu.memory_space<vmem>>, vector<1x32xf32>
    %c0_5 = arith.constant 0 : index
    %c0_6 = arith.constant 0 : index
    %3 = vector.load %arg14[%c0_5, %c0_6] : memref<32x32xbf16, #tpu.memory_space<vmem>>, vector<32x32xbf16>
    %c0_7 = arith.constant 0 : index
    %c0_8 = arith.constant 0 : index
    %4 = vector.load %arg15[%c0_7, %c0_8] : memref<16x32xbf16, #tpu.memory_space<vmem>>, vector<16x32xbf16>
    %c0_9 = arith.constant 0 : index
    %c0_10 = arith.constant 0 : index
    %5 = vector.load %arg16[%c0_9, %c0_10] : memref<32x32xbf16, #tpu.memory_space<vmem>>, vector<32x32xbf16>
    %c0_11 = arith.constant 0 : index
    %c0_12 = arith.constant 0 : index
    %6 = vector.load %arg17[%c0_11, %c0_12] : memref<32x32xbf16, #tpu.memory_space<vmem>>, vector<32x32xbf16>
    %c0_13 = arith.constant 0 : index
    %c0_14 = arith.constant 0 : index
    %7 = vector.load %arg18[%c0_13, %c0_14] : memref<32x32xbf16, #tpu.memory_space<vmem>>, vector<32x32xbf16>
    %c0_15 = arith.constant 0 : index
    %c0_16 = arith.constant 0 : index
    %8 = vector.load %arg19[%c0_15, %c0_16] : memref<1x32xf32, #tpu.memory_space<vmem>>, vector<1x32xf32>
    %c0_17 = arith.constant 0 : index
    %c0_18 = arith.constant 0 : index
    %9 = vector.load %arg20[%c0_17, %c0_18] : memref<32x32xbf16, #tpu.memory_space<vmem>>, vector<32x32xbf16>
    %c0_19 = arith.constant 0 : index
    %c0_20 = arith.constant 0 : index
    %10 = vector.load %arg21[%c0_19, %c0_20] : memref<1x32xf32, #tpu.memory_space<vmem>>, vector<1x32xf32>
    %c0_21 = arith.constant 0 : index
    %c0_22 = arith.constant 0 : index
    %11 = vector.load %arg22[%c0_21, %c0_22] : memref<1x4xf32, #tpu.memory_space<vmem>>, vector<1x4xf32>
    %c0_23 = arith.constant 0 : index
    %c0_24 = arith.constant 0 : index
    %12 = vector.load %arg0[%c0_23, %c0_24] : memref<16x1xi32, #tpu.memory_space<vmem>>, vector<16x1xi32>
    %13 = tpu.iota {dimensions = array<i32: 1>} : vector<16x64xi32>
    %14 = vector.broadcast %12 : vector<16x1xi32> to vector<16x64xi32>
    %15 = arith.cmpi eq, %14, %13 : vector<16x64xi32>
    %cst = arith.constant 1.000000e+00 : f32
    %cst_25 = arith.constant 0.000000e+00 : f32
    %16 = vector.broadcast %cst : f32 to vector<16x64xf32>
    %17 = vector.broadcast %cst_25 : f32 to vector<16x64xf32>
    %18 = arith.select %15, %16, %17 : vector<16x64xi1>, vector<16x64xf32>
    %19 = arith.truncf %18 : vector<16x64xf32> to vector<16x64xbf16>
    %cst_26 = arith.constant dense<0.000000e+00> : vector<16x32xf32>
    %20 = tpu.matmul %19, %0, %cst_26 {dimension_numbers = #tpu.dot_dimension_numbers<[1], [0], [0], [1], [0, 0, 1, 1], [], []>} : vector<16x64xbf16>, vector<64x32xbf16>, vector<16x32xf32> -> vector<16x32xf32>
    %c0_27 = arith.constant 0 : index
    %c0_28 = arith.constant 0 : index
    %21 = vector.load %arg1[%c0_27, %c0_28] : memref<16x1xf32, #tpu.memory_space<vmem>>, vector<16x1xf32>
    %22 = vector.broadcast %21 : vector<16x1xf32> to vector<16x32xf32>
    %23 = arith.mulf %20, %22 : vector<16x32xf32>
    %24 = vector.shape_cast %23 : vector<16x32xf32> to vector<2x8x32xf32>
    %cst_29 = arith.constant dense<0.000000e+00> : vector<2x32xf32>
    %25 = vector.multi_reduction <add>, %24, %cst_29 [1] : vector<2x8x32xf32> to vector<2x32xf32>
    %c0_30 = arith.constant 0 : index
    %c0_31 = arith.constant 0 : index
    %26 = vector.load %arg2[%c0_30, %c0_31] : memref<2x1xf32, #tpu.memory_space<vmem>>, vector<2x1xf32>
    %27 = vector.broadcast %26 : vector<2x1xf32> to vector<2x32xf32>
    %28 = arith.mulf %25, %27 : vector<2x32xf32>
    %29 = arith.truncf %28 : vector<2x32xf32> to vector<2x32xbf16>
    %cst_32 = arith.constant dense<0.000000e+00> : vector<2x32xf32>
    %30 = tpu.matmul %29, %1, %cst_32 {dimension_numbers = #tpu.dot_dimension_numbers<[1], [0], [0], [1], [0, 0, 1, 1], [], []>} : vector<2x32xbf16>, vector<32x32xbf16>, vector<2x32xf32> -> vector<2x32xf32>
    %31 = vector.broadcast %2 : vector<1x32xf32> to vector<2x32xf32>
    %32 = arith.addf %30, %31 : vector<2x32xf32>
    %33 = math.tanh %32 : vector<2x32xf32>
    %c0_33 = arith.constant 0 : index
    %c0_34 = arith.constant 0 : index
    %34 = vector.load %arg3[%c0_33, %c0_34] : memref<32x1xi32, #tpu.memory_space<vmem>>, vector<32x1xi32>
    %35 = tpu.iota {dimensions = array<i32: 1>} : vector<32x64xi32>
    %36 = vector.broadcast %34 : vector<32x1xi32> to vector<32x64xi32>
    %37 = arith.cmpi eq, %36, %35 : vector<32x64xi32>
    %cst_35 = arith.constant 1.000000e+00 : f32
    %cst_36 = arith.constant 0.000000e+00 : f32
    %38 = vector.broadcast %cst_35 : f32 to vector<32x64xf32>
    %39 = vector.broadcast %cst_36 : f32 to vector<32x64xf32>
    %40 = arith.select %37, %38, %39 : vector<32x64xi1>, vector<32x64xf32>
    %41 = arith.truncf %40 : vector<32x64xf32> to vector<32x64xbf16>
    %cst_37 = arith.constant dense<0.000000e+00> : vector<32x32xf32>
    %42 = tpu.matmul %41, %0, %cst_37 {dimension_numbers = #tpu.dot_dimension_numbers<[1], [0], [0], [1], [0, 0, 1, 1], [], []>} : vector<32x64xbf16>, vector<64x32xbf16>, vector<32x32xf32> -> vector<32x32xf32>
    %c0_38 = arith.constant 0 : index
    %c0_39 = arith.constant 0 : index
    %43 = vector.load %arg4[%c0_38, %c0_39] : memref<32x1xf32, #tpu.memory_space<vmem>>, vector<32x1xf32>
    %44 = vector.broadcast %43 : vector<32x1xf32> to vector<32x32xf32>
    %45 = arith.mulf %42, %44 : vector<32x32xf32>
    %46 = vector.shape_cast %45 : vector<32x32xf32> to vector<4x8x32xf32>
    %cst_40 = arith.constant dense<0.000000e+00> : vector<4x32xf32>
    %47 = vector.multi_reduction <add>, %46, %cst_40 [1] : vector<4x8x32xf32> to vector<4x32xf32>
    %c0_41 = arith.constant 0 : index
    %c0_42 = arith.constant 0 : index
    %48 = vector.load %arg5[%c0_41, %c0_42] : memref<4x1xf32, #tpu.memory_space<vmem>>, vector<4x1xf32>
    %49 = vector.broadcast %48 : vector<4x1xf32> to vector<4x32xf32>
    %50 = arith.mulf %47, %49 : vector<4x32xf32>
    %51 = arith.truncf %50 : vector<4x32xf32> to vector<4x32xbf16>
    %cst_43 = arith.constant dense<0.000000e+00> : vector<4x32xf32>
    %52 = tpu.matmul %51, %1, %cst_43 {dimension_numbers = #tpu.dot_dimension_numbers<[1], [0], [0], [1], [0, 0, 1, 1], [], []>} : vector<4x32xbf16>, vector<32x32xbf16>, vector<4x32xf32> -> vector<4x32xf32>
    %53 = vector.broadcast %2 : vector<1x32xf32> to vector<4x32xf32>
    %54 = arith.addf %52, %53 : vector<4x32xf32>
    %55 = math.tanh %54 : vector<4x32xf32>
    %56 = arith.truncf %33 : vector<2x32xf32> to vector<2x32xbf16>
    %cst_44 = arith.constant dense<0.000000e+00> : vector<2x32xf32>
    %57 = tpu.matmul %56, %9, %cst_44 {dimension_numbers = #tpu.dot_dimension_numbers<[1], [0], [0], [1], [0, 0, 1, 1], [], []>} : vector<2x32xbf16>, vector<32x32xbf16>, vector<2x32xf32> -> vector<2x32xf32>
    %58 = vector.broadcast %10 : vector<1x32xf32> to vector<2x32xf32>
    %59 = arith.addf %57, %58 : vector<2x32xf32>
    %60 = arith.truncf %59 : vector<2x32xf32> to vector<2x32xbf16>
    %61 = arith.truncf %55 : vector<4x32xf32> to vector<4x32xbf16>
    %cst_45 = arith.constant dense<0.000000e+00> : vector<2x4xf32>
    %62 = tpu.matmul %60, %61, %cst_45 {dimension_numbers = #tpu.dot_dimension_numbers<[1], [1], [0], [0], [0, 0, 1, 0], [], []>} : vector<2x32xbf16>, vector<4x32xbf16>, vector<2x4xf32> -> vector<2x4xf32>
    %63 = vector.broadcast %11 : vector<1x4xf32> to vector<2x4xf32>
    %64 = arith.addf %62, %63 : vector<2x4xf32>
    %c0_46 = arith.constant 0 : index
    %c0_47 = arith.constant 0 : index
    %65 = vector.load %arg8[%c0_46, %c0_47] : memref<32x1xi32, #tpu.memory_space<vmem>>, vector<32x1xi32>
    %66 = tpu.iota {dimensions = array<i32: 1>} : vector<32x32xi32>
    %67 = vector.broadcast %65 : vector<32x1xi32> to vector<32x32xi32>
    %68 = arith.cmpi eq, %67, %66 : vector<32x32xi32>
    %cst_48 = arith.constant 1.000000e+00 : f32
    %cst_49 = arith.constant 0.000000e+00 : f32
    %69 = vector.broadcast %cst_48 : f32 to vector<32x32xf32>
    %70 = vector.broadcast %cst_49 : f32 to vector<32x32xf32>
    %71 = arith.select %68, %69, %70 : vector<32x32xi1>, vector<32x32xf32>
    %72 = arith.truncf %71 : vector<32x32xf32> to vector<32x32xbf16>
    %cst_50 = arith.constant dense<0.000000e+00> : vector<32x32xf32>
    %73 = tpu.matmul %72, %3, %cst_50 {dimension_numbers = #tpu.dot_dimension_numbers<[1], [0], [0], [1], [0, 0, 1, 1], [], []>} : vector<32x32xbf16>, vector<32x32xbf16>, vector<32x32xf32> -> vector<32x32xf32>
    %74 = vector.shape_cast %73 : vector<32x32xf32> to vector<4x8x32xf32>
    %cst_51 = arith.constant dense<0.000000e+00> : vector<4x32xf32>
    %75 = vector.multi_reduction <add>, %74, %cst_51 [1] : vector<4x8x32xf32> to vector<4x32xf32>
    %cst_52 = arith.constant 0.166666672 : f32
    %76 = vector.broadcast %cst_52 : f32 to vector<4x32xf32>
    %77 = arith.mulf %75, %76 : vector<4x32xf32>
    %c0_53 = arith.constant 0 : index
    %c0_54 = arith.constant 0 : index
    %78 = vector.load %arg9[%c0_53, %c0_54] : memref<32x1xi32, #tpu.memory_space<vmem>>, vector<32x1xi32>
    %79 = tpu.iota {dimensions = array<i32: 1>} : vector<32x16xi32>
    %80 = vector.broadcast %78 : vector<32x1xi32> to vector<32x16xi32>
    %81 = arith.cmpi eq, %80, %79 : vector<32x16xi32>
    %cst_55 = arith.constant 1.000000e+00 : f32
    %cst_56 = arith.constant 0.000000e+00 : f32
    %82 = vector.broadcast %cst_55 : f32 to vector<32x16xf32>
    %83 = vector.broadcast %cst_56 : f32 to vector<32x16xf32>
    %84 = arith.select %81, %82, %83 : vector<32x16xi1>, vector<32x16xf32>
    %85 = arith.truncf %84 : vector<32x16xf32> to vector<32x16xbf16>
    %cst_57 = arith.constant dense<0.000000e+00> : vector<32x32xf32>
    %86 = tpu.matmul %85, %4, %cst_57 {dimension_numbers = #tpu.dot_dimension_numbers<[1], [0], [0], [1], [0, 0, 1, 1], [], []>} : vector<32x16xbf16>, vector<16x32xbf16>, vector<32x32xf32> -> vector<32x32xf32>
    %87 = vector.shape_cast %86 : vector<32x32xf32> to vector<4x8x32xf32>
    %cst_58 = arith.constant dense<0.000000e+00> : vector<4x32xf32>
    %88 = vector.multi_reduction <add>, %87, %cst_58 [1] : vector<4x8x32xf32> to vector<4x32xf32>
    %cst_59 = arith.constant 2.000000e-01 : f32
    %89 = vector.broadcast %cst_59 : f32 to vector<4x32xf32>
    %90 = arith.mulf %88, %89 : vector<4x32xf32>
    %91 = arith.truncf %77 : vector<4x32xf32> to vector<4x32xbf16>
    %cst_60 = arith.constant dense<0.000000e+00> : vector<4x32xf32>
    %92 = tpu.matmul %91, %5, %cst_60 {dimension_numbers = #tpu.dot_dimension_numbers<[1], [0], [0], [1], [0, 0, 1, 1], [], []>} : vector<4x32xbf16>, vector<32x32xbf16>, vector<4x32xf32> -> vector<4x32xf32>
    %93 = arith.truncf %90 : vector<4x32xf32> to vector<4x32xbf16>
    %cst_61 = arith.constant dense<0.000000e+00> : vector<4x32xf32>
    %94 = tpu.matmul %93, %6, %cst_61 {dimension_numbers = #tpu.dot_dimension_numbers<[1], [0], [0], [1], [0, 0, 1, 1], [], []>} : vector<4x32xbf16>, vector<32x32xbf16>, vector<4x32xf32> -> vector<4x32xf32>
    %95 = arith.addf %92, %94 : vector<4x32xf32>
    %96 = arith.truncf %55 : vector<4x32xf32> to vector<4x32xbf16>
    %cst_62 = arith.constant dense<0.000000e+00> : vector<4x32xf32>
    %97 = tpu.matmul %96, %7, %cst_62 {dimension_numbers = #tpu.dot_dimension_numbers<[1], [0], [0], [1], [0, 0, 1, 1], [], []>} : vector<4x32xbf16>, vector<32x32xbf16>, vector<4x32xf32> -> vector<4x32xf32>
    %98 = arith.addf %95, %97 : vector<4x32xf32>
    %99 = vector.broadcast %8 : vector<1x32xf32> to vector<4x32xf32>
    %100 = arith.addf %98, %99 : vector<4x32xf32>
    %101 = math.tanh %100 : vector<4x32xf32>
    %102 = arith.truncf %59 : vector<2x32xf32> to vector<2x32xbf16>
    %103 = arith.truncf %101 : vector<4x32xf32> to vector<4x32xbf16>
    %cst_63 = arith.constant dense<0.000000e+00> : vector<2x4xf32>
    %104 = tpu.matmul %102, %103, %cst_63 {dimension_numbers = #tpu.dot_dimension_numbers<[1], [1], [0], [0], [0, 0, 1, 0], [], []>} : vector<2x32xbf16>, vector<4x32xbf16>, vector<2x4xf32> -> vector<2x4xf32>
    %105 = vector.broadcast %11 : vector<1x4xf32> to vector<2x4xf32>
    %106 = arith.addf %104, %105 : vector<2x4xf32>
    %c0_64 = arith.constant 0 : index
    %c0_65 = arith.constant 0 : index
    %107 = vector.load %arg6[%c0_64, %c0_65] : memref<16x1xi32, #tpu.memory_space<vmem>>, vector<16x1xi32>
    %108 = tpu.iota {dimensions = array<i32: 1>} : vector<16x32xi32>
    %109 = vector.broadcast %107 : vector<16x1xi32> to vector<16x32xi32>
    %110 = arith.cmpi eq, %109, %108 : vector<16x32xi32>
    %cst_66 = arith.constant 1.000000e+00 : f32
    %cst_67 = arith.constant 0.000000e+00 : f32
    %111 = vector.broadcast %cst_66 : f32 to vector<16x32xf32>
    %112 = vector.broadcast %cst_67 : f32 to vector<16x32xf32>
    %113 = arith.select %110, %111, %112 : vector<16x32xi1>, vector<16x32xf32>
    %114 = arith.truncf %113 : vector<16x32xf32> to vector<16x32xbf16>
    %cst_68 = arith.constant dense<0.000000e+00> : vector<16x32xf32>
    %115 = tpu.matmul %114, %3, %cst_68 {dimension_numbers = #tpu.dot_dimension_numbers<[1], [0], [0], [1], [0, 0, 1, 1], [], []>} : vector<16x32xbf16>, vector<32x32xbf16>, vector<16x32xf32> -> vector<16x32xf32>
    %116 = vector.shape_cast %115 : vector<16x32xf32> to vector<2x8x32xf32>
    %cst_69 = arith.constant dense<0.000000e+00> : vector<2x32xf32>
    %117 = vector.multi_reduction <add>, %116, %cst_69 [1] : vector<2x8x32xf32> to vector<2x32xf32>
    %cst_70 = arith.constant 0.166666672 : f32
    %118 = vector.broadcast %cst_70 : f32 to vector<2x32xf32>
    %119 = arith.mulf %117, %118 : vector<2x32xf32>
    %c0_71 = arith.constant 0 : index
    %c0_72 = arith.constant 0 : index
    %120 = vector.load %arg7[%c0_71, %c0_72] : memref<16x1xi32, #tpu.memory_space<vmem>>, vector<16x1xi32>
    %121 = tpu.iota {dimensions = array<i32: 1>} : vector<16x16xi32>
    %122 = vector.broadcast %120 : vector<16x1xi32> to vector<16x16xi32>
    %123 = arith.cmpi eq, %122, %121 : vector<16x16xi32>
    %cst_73 = arith.constant 1.000000e+00 : f32
    %cst_74 = arith.constant 0.000000e+00 : f32
    %124 = vector.broadcast %cst_73 : f32 to vector<16x16xf32>
    %125 = vector.broadcast %cst_74 : f32 to vector<16x16xf32>
    %126 = arith.select %123, %124, %125 : vector<16x16xi1>, vector<16x16xf32>
    %127 = arith.truncf %126 : vector<16x16xf32> to vector<16x16xbf16>
    %cst_75 = arith.constant dense<0.000000e+00> : vector<16x32xf32>
    %128 = tpu.matmul %127, %4, %cst_75 {dimension_numbers = #tpu.dot_dimension_numbers<[1], [0], [0], [1], [0, 0, 1, 1], [], []>} : vector<16x16xbf16>, vector<16x32xbf16>, vector<16x32xf32> -> vector<16x32xf32>
    %129 = vector.shape_cast %128 : vector<16x32xf32> to vector<2x8x32xf32>
    %cst_76 = arith.constant dense<0.000000e+00> : vector<2x32xf32>
    %130 = vector.multi_reduction <add>, %129, %cst_76 [1] : vector<2x8x32xf32> to vector<2x32xf32>
    %cst_77 = arith.constant 2.000000e-01 : f32
    %131 = vector.broadcast %cst_77 : f32 to vector<2x32xf32>
    %132 = arith.mulf %130, %131 : vector<2x32xf32>
    %133 = arith.truncf %119 : vector<2x32xf32> to vector<2x32xbf16>
    %cst_78 = arith.constant dense<0.000000e+00> : vector<2x32xf32>
    %134 = tpu.matmul %133, %5, %cst_78 {dimension_numbers = #tpu.dot_dimension_numbers<[1], [0], [0], [1], [0, 0, 1, 1], [], []>} : vector<2x32xbf16>, vector<32x32xbf16>, vector<2x32xf32> -> vector<2x32xf32>
    %135 = arith.truncf %132 : vector<2x32xf32> to vector<2x32xbf16>
    %cst_79 = arith.constant dense<0.000000e+00> : vector<2x32xf32>
    %136 = tpu.matmul %135, %6, %cst_79 {dimension_numbers = #tpu.dot_dimension_numbers<[1], [0], [0], [1], [0, 0, 1, 1], [], []>} : vector<2x32xbf16>, vector<32x32xbf16>, vector<2x32xf32> -> vector<2x32xf32>
    %137 = arith.addf %134, %136 : vector<2x32xf32>
    %138 = arith.truncf %33 : vector<2x32xf32> to vector<2x32xbf16>
    %cst_80 = arith.constant dense<0.000000e+00> : vector<2x32xf32>
    %139 = tpu.matmul %138, %7, %cst_80 {dimension_numbers = #tpu.dot_dimension_numbers<[1], [0], [0], [1], [0, 0, 1, 1], [], []>} : vector<2x32xbf16>, vector<32x32xbf16>, vector<2x32xf32> -> vector<2x32xf32>
    %140 = arith.addf %137, %139 : vector<2x32xf32>
    %141 = vector.broadcast %8 : vector<1x32xf32> to vector<2x32xf32>
    %142 = arith.addf %140, %141 : vector<2x32xf32>
    %143 = math.tanh %142 : vector<2x32xf32>
    %144 = arith.truncf %143 : vector<2x32xf32> to vector<2x32xbf16>
    %cst_81 = arith.constant dense<0.000000e+00> : vector<2x32xf32>
    %145 = tpu.matmul %144, %9, %cst_81 {dimension_numbers = #tpu.dot_dimension_numbers<[1], [0], [0], [1], [0, 0, 1, 1], [], []>} : vector<2x32xbf16>, vector<32x32xbf16>, vector<2x32xf32> -> vector<2x32xf32>
    %146 = vector.broadcast %10 : vector<1x32xf32> to vector<2x32xf32>
    %147 = arith.addf %145, %146 : vector<2x32xf32>
    %148 = arith.truncf %147 : vector<2x32xf32> to vector<2x32xbf16>
    %149 = arith.truncf %101 : vector<4x32xf32> to vector<4x32xbf16>
    %cst_82 = arith.constant dense<0.000000e+00> : vector<2x4xf32>
    %150 = tpu.matmul %148, %149, %cst_82 {dimension_numbers = #tpu.dot_dimension_numbers<[1], [1], [0], [0], [0, 0, 1, 0], [], []>} : vector<2x32xbf16>, vector<4x32xbf16>, vector<2x4xf32> -> vector<2x4xf32>
    %151 = vector.broadcast %11 : vector<1x4xf32> to vector<2x4xf32>
    %152 = arith.addf %150, %151 : vector<2x4xf32>
    %153 = arith.negf %64 : vector<2x4xf32>
    %154 = math.exp %153 : vector<2x4xf32>
    %cst_83 = arith.constant 1.000000e+00 : f32
    %155 = vector.broadcast %cst_83 : f32 to vector<2x4xf32>
    %156 = arith.addf %155, %154 : vector<2x4xf32>
    %157 = arith.divf %155, %156 : vector<2x4xf32>
    %cst_84 = arith.constant 5.000000e-01 : f32
    %158 = vector.broadcast %cst_84 : f32 to vector<2x4xf32>
    %159 = arith.mulf %158, %157 : vector<2x4xf32>
    %160 = arith.negf %106 : vector<2x4xf32>
    %161 = math.exp %160 : vector<2x4xf32>
    %cst_85 = arith.constant 1.000000e+00 : f32
    %162 = vector.broadcast %cst_85 : f32 to vector<2x4xf32>
    %163 = arith.addf %162, %161 : vector<2x4xf32>
    %164 = arith.divf %162, %163 : vector<2x4xf32>
    %cst_86 = arith.constant 5.000000e-01 : f32
    %165 = vector.broadcast %cst_86 : f32 to vector<2x4xf32>
    %166 = arith.mulf %165, %164 : vector<2x4xf32>
    %167 = arith.addf %159, %166 : vector<2x4xf32>
    %c0_87 = arith.constant 0 : index
    %c0_88 = arith.constant 0 : index
    %168 = vector.load %arg23[%c0_87, %c0_88] : memref<2x4xf32, #tpu.memory_space<vmem>>, vector<2x4xf32>
    tpu.vector_store %arg23[%c0_87, %c0_88], %167 {strides = array<i32>} : memref<2x4xf32, #tpu.memory_space<vmem>>, vector<2x4xf32>,
    %c0_89 = arith.constant 0 : index
    %c0_90 = arith.constant 0 : index
    %169 = vector.load %arg10[%c0_89, %c0_90] : memref<2x4xf32, #tpu.memory_space<vmem>>, vector<2x4xf32>
    %cst_91 = arith.constant 0.000000e+00 : f32
    %170 = vector.broadcast %cst_91 : f32 to vector<2x4xf32>
    %171 = arith.maximumf %64, %170 : vector<2x4xf32>
    %172 = arith.mulf %64, %169 : vector<2x4xf32>
    %173 = arith.subf %171, %172 : vector<2x4xf32>
    %174 = math.absf %64 : vector<2x4xf32>
    %cst_92 = arith.constant 0.000000e+00 : f32
    %175 = vector.broadcast %cst_92 : f32 to vector<2x4xf32>
    %176 = arith.subf %175, %174 : vector<2x4xf32>
    %177 = math.exp %176 : vector<2x4xf32>
    %178 = math.log1p %177 : vector<2x4xf32>
    %179 = arith.addf %173, %178 : vector<2x4xf32>
    %180 = vector.shape_cast %179 : vector<2x4xf32> to vector<1x2x4xf32>
    %cst_93 = arith.constant dense<0.000000e+00> : vector<1xf32>
    %181 = vector.multi_reduction <add>, %180, %cst_93 [1, 2] : vector<1x2x4xf32> to vector<1xf32>
    %182 = vector.shape_cast %181 : vector<1xf32> to vector<1x1x1xf32>
    %183 = vector.extract %182[0, 0, 0] : f32 from vector<1x1x1xf32>
    %cst_94 = arith.constant 8.000000e+00 : f32
    %184 = arith.divf %183, %cst_94 : f32
    %cst_95 = arith.constant 3.000000e+00 : f32
    %185 = arith.mulf %cst_95, %184 : f32
    %cst_96 = arith.constant 0.000000e+00 : f32
    %186 = vector.broadcast %cst_96 : f32 to vector<2x4xf32>
    %187 = arith.maximumf %152, %186 : vector<2x4xf32>
    %188 = arith.mulf %152, %169 : vector<2x4xf32>
    %189 = arith.subf %187, %188 : vector<2x4xf32>
    %190 = math.absf %152 : vector<2x4xf32>
    %cst_97 = arith.constant 0.000000e+00 : f32
    %191 = vector.broadcast %cst_97 : f32 to vector<2x4xf32>
    %192 = arith.subf %191, %190 : vector<2x4xf32>
    %193 = math.exp %192 : vector<2x4xf32>
    %194 = math.log1p %193 : vector<2x4xf32>
    %195 = arith.addf %189, %194 : vector<2x4xf32>
    %196 = vector.shape_cast %195 : vector<2x4xf32> to vector<1x2x4xf32>
    %cst_98 = arith.constant dense<0.000000e+00> : vector<1xf32>
    %197 = vector.multi_reduction <add>, %196, %cst_98 [1, 2] : vector<1x2x4xf32> to vector<1xf32>
    %198 = vector.shape_cast %197 : vector<1xf32> to vector<1x1x1xf32>
    %199 = vector.extract %198[0, 0, 0] : f32 from vector<1x1x1xf32>
    %cst_99 = arith.constant 8.000000e+00 : f32
    %200 = arith.divf %199, %cst_99 : f32
    %cst_100 = arith.constant 2.000000e+00 : f32
    %201 = arith.mulf %cst_100, %200 : f32
    %202 = arith.addf %185, %201 : f32
    %cst_101 = arith.constant 0.000000e+00 : f32
    %203 = vector.broadcast %cst_101 : f32 to vector<2x4xf32>
    %204 = arith.maximumf %106, %203 : vector<2x4xf32>
    %205 = arith.mulf %106, %169 : vector<2x4xf32>
    %206 = arith.subf %204, %205 : vector<2x4xf32>
    %207 = math.absf %106 : vector<2x4xf32>
    %cst_102 = arith.constant 0.000000e+00 : f32
    %208 = vector.broadcast %cst_102 : f32 to vector<2x4xf32>
    %209 = arith.subf %208, %207 : vector<2x4xf32>
    %210 = math.exp %209 : vector<2x4xf32>
    %211 = math.log1p %210 : vector<2x4xf32>
    %212 = arith.addf %206, %211 : vector<2x4xf32>
    %213 = vector.shape_cast %212 : vector<2x4xf32> to vector<1x2x4xf32>
    %cst_103 = arith.constant dense<0.000000e+00> : vector<1xf32>
    %214 = vector.multi_reduction <add>, %213, %cst_103 [1, 2] : vector<1x2x4xf32> to vector<1xf32>
    %215 = vector.shape_cast %214 : vector<1xf32> to vector<1x1x1xf32>
    %216 = vector.extract %215[0, 0, 0] : f32 from vector<1x1x1xf32>
    %cst_104 = arith.constant 8.000000e+00 : f32
    %217 = arith.divf %216, %cst_104 : f32
    %cst_105 = arith.constant 3.000000e+00 : f32
    %218 = arith.mulf %cst_105, %217 : f32
    %219 = arith.addf %202, %218 : f32
    %c0_106 = arith.constant 0 : index
    %c0_107 = arith.constant 0 : index
    %220 = memref.load %arg24[%c0_106, %c0_107] : memref<1x1xf32, #tpu.memory_space<smem>>
    memref.store %219, %arg24[%c0_106, %c0_107] : memref<1x1xf32, #tpu.memory_space<smem>>
    return
  }
}

</mosaic_0001>

<llo_original>
// kernel: lesicin_forward.1
$region0: #{lesicin_forward.1}
  #allocation0 [shape = 'u32[]', space=smem, size = 0x4, offset = 0x4, fixed_abs, tag = 'smem constant byte address 0x4 - core index']
  #allocation1 [shape = 'u32[144,128]{1,0:T(1,128)}', space=vmem, size = 0x12000, scoped, tag = 'internal scratch']
  %s0 = inlined_call_operand.vmem [shape: s32[16,1], index: 0, kind: input, shape index: {}]
  %s1 = inlined_call_operand.vmem [shape: f32[16,1], index: 1, kind: input, shape index: {}]
  %s2 = inlined_call_operand.vmem [shape: f32[2,1], index: 2, kind: input, shape index: {}]
  %s3 = inlined_call_operand.vmem [shape: s32[32,1], index: 3, kind: input, shape index: {}]
  %s4 = inlined_call_operand.vmem [shape: f32[32,1], index: 4, kind: input, shape index: {}]
  %s5 = inlined_call_operand.vmem [shape: f32[4,1], index: 5, kind: input, shape index: {}]
  %s6 = inlined_call_operand.vmem [shape: s32[16,1], index: 6, kind: input, shape index: {}]
  %s7 = inlined_call_operand.vmem [shape: s32[16,1], index: 7, kind: input, shape index: {}]
  %s8 = inlined_call_operand.vmem [shape: s32[32,1], index: 8, kind: input, shape index: {}]
  %s9 = inlined_call_operand.vmem [shape: s32[32,1], index: 9, kind: input, shape index: {}]
  %s10 = inlined_call_operand.vmem [shape: f32[2,4], index: 10, kind: input, shape index: {}]
  %s11 = inlined_call_operand.vmem [shape: bf16[64,32], index: 11, kind: input, shape index: {}]
  %s12 = inlined_call_operand.vmem [shape: bf16[32,32], index: 12, kind: input, shape index: {}]
  %s13 = inlined_call_operand.vmem [shape: f32[1,32], index: 13, kind: input, shape index: {}]
  %s14 = inlined_call_operand.vmem [shape: bf16[32,32], index: 14, kind: input, shape index: {}]
  %s15 = inlined_call_operand.vmem [shape: bf16[16,32], index: 15, kind: input, shape index: {}]
  %s16 = inlined_call_operand.vmem [shape: bf16[32,32], index: 16, kind: input, shape index: {}]
  %s17 = inlined_call_operand.vmem [shape: bf16[32,32], index: 17, kind: input, shape index: {}]
  %s18 = inlined_call_operand.vmem [shape: bf16[32,32], index: 18, kind: input, shape index: {}]
  %s19 = inlined_call_operand.vmem [shape: f32[1,32], index: 19, kind: input, shape index: {}]
  %s20 = inlined_call_operand.vmem [shape: bf16[32,32], index: 20, kind: input, shape index: {}]
  %s21 = inlined_call_operand.vmem [shape: f32[1,32], index: 21, kind: input, shape index: {}]
  %s22 = inlined_call_operand.vmem [shape: f32[1,4], index: 22, kind: input, shape index: {}]
  %s23 = inlined_call_operand.hbm [shape: f32[2,4], index: 23, kind: output, shape index: {0}]
  %s24 = inlined_call_operand.hbm [shape: f32[1,1], index: 24, kind: output, shape index: {1}]
  %25 = xla_tuple %s23, %s24
  %s26 = sld [smem:[#allocation0]]
  $region110: #{lesicin_forward.1} parent=0
    _
  %s28 = ssub.s32 1, %s26
  %s29 = scalar_select 0, %s28, %s26
  $region1: #{lesicin_forward.1} parent=0
    #allocation2 [shape = 'u8[1024]{0}', space=vmem, size = 0x400, scoped, tag = 'output window, operand 0, single buffered']
    #allocation3 [shape = 's32[1]{0}', space=sflag, size = 0x4, scoped, tag = 'scoped memory for lesicin_forward.1']
    #allocation4 [shape = 's32[1]{0}', space=sflag, size = 0x4, scoped, tag = 'scoped memory for lesicin_forward.1']
    #allocation5 [shape = 'u8[512]{0}', space=smem, size = 0x200, scoped, tag = 'output window, operand 1, single buffered']
    %30 = vsyncpa [#allocation3], 0
    %31 = vsyncpa [#allocation4], 0
    // Predicated region
    $region2: #{lesicin_forward.1} parent=1 // pred_check
      _
    $region3: #{lesicin_forward.1} parent=1 // pred_check_branch
      %33 = sbr.rel (0) target = $region5
    $region4: #{lesicin_forward.1} parent=1 // pred_region
      _
    $region5: #{lesicin_forward.1} parent=1 // pred_fallthru
      _
    // Predicated region
    $region6: #{lesicin_forward.1} parent=1 // pred_check
      _
    $region7: #{lesicin_forward.1} parent=1 // pred_check_branch
      %35 = sbr.rel (0) target = $region9
    $region8: #{lesicin_forward.1} parent=1 // pred_region
      _
    $region9: #{lesicin_forward.1} parent=1 // pred_fallthru
      _
    // Predicated region
    $region10: #{lesicin_forward.1} parent=1 // pred_check
      _
    $region11: #{lesicin_forward.1} parent=1 // pred_check_branch
      %37 = sbr.rel (0) target = $region13
    $region12: #{lesicin_forward.1} parent=1 // pred_region
      _
    $region13: #{lesicin_forward.1} parent=1 // pred_fallthru
      _
    // Predicated region
    $region14: #{lesicin_forward.1} parent=1 // pred_check
      _
    $region15: #{lesicin_forward.1} parent=1 // pred_check_branch
      %39 = sbr.rel (0) target = $region17
    $region16: #{lesicin_forward.1} parent=1 // pred_region
      _
    $region17: #{lesicin_forward.1} parent=1 // pred_fallthru
      _
    // Predicated region
    $region18: #{lesicin_forward.1} parent=1 // pred_check
      _
    $region19: #{lesicin_forward.1} parent=1 // pred_check_branch
      %41 = sbr.rel (0) target = $region21
    $region20: #{lesicin_forward.1} parent=1 // pred_region
      _
    $region21: #{lesicin_forward.1} parent=1 // pred_fallthru
      _
    // Predicated region
    $region22: #{lesicin_forward.1} parent=1 // pred_check
      _
    $region23: #{lesicin_forward.1} parent=1 // pred_check_branch
      %43 = sbr.rel (0) target = $region25
    $region24: #{lesicin_forward.1} parent=1 // pred_region
      _
    $region25: #{lesicin_forward.1} parent=1 // pred_fallthru
      _
    // Predicated region
    $region26: #{lesicin_forward.1} parent=1 // pred_check
      _
    $region27: #{lesicin_forward.1} parent=1 // pred_check_branch
      %45 = sbr.rel (0) target = $region29
    $region28: #{lesicin_forward.1} parent=1 // pred_region
      _
    $region29: #{lesicin_forward.1} parent=1 // pred_fallthru
      _
    // Predicated region
    $region30: #{lesicin_forward.1} parent=1 // pred_check
      _
    $region31: #{lesicin_forward.1} parent=1 // pred_check_branch
      %47 = sbr.rel (0) target = $region33
    $region32: #{lesicin_forward.1} parent=1 // pred_region
      _
    $region33: #{lesicin_forward.1} parent=1 // pred_fallthru
      _
    // Predicated region
    $region34: #{lesicin_forward.1} parent=1 // pred_check
      _
    $region35: #{lesicin_forward.1} parent=1 // pred_check_branch
      %49 = sbr.rel (0) target = $region37
    $region36: #{lesicin_forward.1} parent=1 // pred_region
      _
    $region37: #{lesicin_forward.1} parent=1 // pred_fallthru
      _
    // Predicated region
    $region38: #{lesicin_forward.1} parent=1 // pred_check
      _
    $region39: #{lesicin_forward.1} parent=1 // pred_check_branch
      %51 = sbr.rel (0) target = $region41
    $region40: #{lesicin_forward.1} parent=1 // pred_region
      _
    $region41: #{lesicin_forward.1} parent=1 // pred_fallthru
      _
    // Predicated region
    $region42: #{lesicin_forward.1} parent=1 // pred_check
      _
    $region43: #{lesicin_forward.1} parent=1 // pred_check_branch
      %53 = sbr.rel (0) target = $region45
    $region44: #{lesicin_forward.1} parent=1 // pred_region
      _
    $region45: #{lesicin_forward.1} parent=1 // pred_fallthru
      _
    // Predicated region
    $region46: #{lesicin_forward.1} parent=1 // pred_check
      _
    $region47: #{lesicin_forward.1} parent=1 // pred_check_branch
      %55 = sbr.rel (0) target = $region49
    $region48: #{lesicin_forward.1} parent=1 // pred_region
      _
    $region49: #{lesicin_forward.1} parent=1 // pred_fallthru
      _
    // Predicated region
    $region50: #{lesicin_forward.1} parent=1 // pred_check
      _
    $region51: #{lesicin_forward.1} parent=1 // pred_check_branch
      %57 = sbr.rel (0) target = $region53
    $region52: #{lesicin_forward.1} parent=1 // pred_region
      _
    $region53: #{lesicin_forward.1} parent=1 // pred_fallthru
      _
    // Predicated region
    $region54: #{lesicin_forward.1} parent=1 // pred_check
      _
    $region55: #{lesicin_forward.1} parent=1 // pred_check_branch
      %59 = sbr.rel (0) target = $region57
    $region56: #{lesicin_forward.1} parent=1 // pred_region
      _
    $region57: #{lesicin_forward.1} parent=1 // pred_fallthru
      _
    // Predicated region
    $region58: #{lesicin_forward.1} parent=1 // pred_check
      _
    $region59: #{lesicin_forward.1} parent=1 // pred_check_branch
      %61 = sbr.rel (0) target = $region61
    $region60: #{lesicin_forward.1} parent=1 // pred_region
      _
    $region61: #{lesicin_forward.1} parent=1 // pred_fallthru
      _
    // Predicated region
    $region62: #{lesicin_forward.1} parent=1 // pred_check
      _
    $region63: #{lesicin_forward.1} parent=1 // pred_check_branch
      %63 = sbr.rel (0) target = $region65
    $region64: #{lesicin_forward.1} parent=1 // pred_region
      _
    $region65: #{lesicin_forward.1} parent=1 // pred_fallthru
      _
    // Predicated region
    $region66: #{lesicin_forward.1} parent=1 // pred_check
      _
    $region67: #{lesicin_forward.1} parent=1 // pred_check_branch
      %65 = sbr.rel (0) target = $region69
    $region68: #{lesicin_forward.1} parent=1 // pred_region
      _
    $region69: #{lesicin_forward.1} parent=1 // pred_fallthru
      _
    // Predicated region
    $region70: #{lesicin_forward.1} parent=1 // pred_check
      _
    $region71: #{lesicin_forward.1} parent=1 // pred_check_branch
      %67 = sbr.rel (0) target = $region73
    $region72: #{lesicin_forward.1} parent=1 // pred_region
      _
    $region73: #{lesicin_forward.1} parent=1 // pred_fallthru
      _
    // Predicated region
    $region74: #{lesicin_forward.1} parent=1 // pred_check
      _
    $region75: #{lesicin_forward.1} parent=1 // pred_check_branch
      %69 = sbr.rel (0) target = $region77
    $region76: #{lesicin_forward.1} parent=1 // pred_region
      _
    $region77: #{lesicin_forward.1} parent=1 // pred_fallthru
      _
    // Predicated region
    $region78: #{lesicin_forward.1} parent=1 // pred_check
      _
    $region79: #{lesicin_forward.1} parent=1 // pred_check_branch
      %71 = sbr.rel (0) target = $region81
    $region80: #{lesicin_forward.1} parent=1 // pred_region
      _
    $region81: #{lesicin_forward.1} parent=1 // pred_fallthru
      _
    // Predicated region
    $region82: #{lesicin_forward.1} parent=1 // pred_check
      _
    $region83: #{lesicin_forward.1} parent=1 // pred_check_branch
      %73 = sbr.rel (0) target = $region85
    $region84: #{lesicin_forward.1} parent=1 // pred_region
      _
    $region85: #{lesicin_forward.1} parent=1 // pred_fallthru
      _
    // Predicated region
    $region86: #{lesicin_forward.1} parent=1 // pred_check
      _
    $region87: #{lesicin_forward.1} parent=1 // pred_check_branch
      %75 = sbr.rel (0) target = $region89
    $region88: #{lesicin_forward.1} parent=1 // pred_region
      _
    $region89: #{lesicin_forward.1} parent=1 // pred_fallthru
      _
    // Predicated region
    $region90: #{lesicin_forward.1} parent=1 // pred_check
      _
    $region91: #{lesicin_forward.1} parent=1 // pred_check_branch
      %77 = sbr.rel (0) target = $region93
    $region92: #{lesicin_forward.1} parent=1 // pred_region
      _
    $region93: #{lesicin_forward.1} parent=1 // pred_fallthru
      _
    %v79 = vld [vmem:[%s11] sm:$0xf]
    %v80 = vld [vmem:[%s11 + $0x4] sm:$0xf]
    %v81 = vld [vmem:[%s11 + $0x8] sm:$0xf]
    %v82 = vld [vmem:[%s11 + $0xc] sm:$0xf]
    %v83 = vld [vmem:[%s11 + $0x10] sm:$0xf]
    %v84 = vld [vmem:[%s11 + $0x14] sm:$0xf]
    %v85 = vld [vmem:[%s11 + $0x18] sm:$0xf]
    %v86 = vld [vmem:[%s11 + $0x1c] sm:$0xf]
    %v87 = vld [vmem:[%s12] sm:$0xf]
    %v88 = vld [vmem:[%s12 + $0x4] sm:$0xf]
    %v89 = vld [vmem:[%s12 + $0x8] sm:$0xf]
    %v90 = vld [vmem:[%s12 + $0xc] sm:$0xf]
    %v91 = vld [vmem:[%s13] sm:$0x1]
    %v92 = vld [vmem:[%s14] sm:$0xf]
    %v93 = vld [vmem:[%s14 + $0x4] sm:$0xf]
    %v94 = vld [vmem:[%s14 + $0x8] sm:$0xf]
    %v95 = vld [vmem:[%s14 + $0xc] sm:$0xf]
    %v96 = vld [vmem:[%s15] sm:$0xf]
    %v97 = vld [vmem:[%s15 + $0x4] sm:$0xf]
    %v98 = vld [vmem:[%s16] sm:$0xf]
    %v99 = vld [vmem:[%s16 + $0x4] sm:$0xf]
    %v100 = vld [vmem:[%s16 + $0x8] sm:$0xf]
    %v101 = vld [vmem:[%s16 + $0xc] sm:$0xf]
    %v102 = vld [vmem:[%s17] sm:$0xf]
    %v103 = vld [vmem:[%s17 + $0x4] sm:$0xf]
    %v104 = vld [vmem:[%s17 + $0x8] sm:$0xf]
    %v105 = vld [vmem:[%s17 + $0xc] sm:$0xf]
    %v106 = vld [vmem:[%s18] sm:$0xf]
    %v107 = vld [vmem:[%s18 + $0x4] sm:$0xf]
    %v108 = vld [vmem:[%s18 + $0x8] sm:$0xf]
    %v109 = vld [vmem:[%s18 + $0xc] sm:$0xf]
    %v110 = vld [vmem:[%s19] sm:$0x1]
    %v111 = vld [vmem:[%s20] sm:$0xf]
    %v112 = vld [vmem:[%s20 + $0x4] sm:$0xf]
    %v113 = vld [vmem:[%s20 + $0x8] sm:$0xf]
    %v114 = vld [vmem:[%s20 + $0xc] sm:$0xf]
    %v115 = vld [vmem:[%s21] sm:$0x1]
    %v116 = vld [vmem:[%s22] sm:$0x1]
    %v117 = vld [vmem:[%s0] sm:$0xff]
    %v118 = vld [vmem:[%s0 + $0x8] sm:$0xff]
    %v119 = vlaneseq
    %v120 = vand.u32 %v119, 127
    %121 = vset.pattern.permute.xlu0 0
    %122 = vperm.xlu0 %121, %v117
    %v123 = vpop.permute.xlu0 %122
    %124 = vset.pattern.permute.xlu0 0
    %125 = vperm.xlu0 %124, %v118
    %v126 = vpop.permute.xlu0 %125
    %vm127 = vcmp.eq.s32.totalorder %v123, %v120
    %vm128 = vcmp.eq.s32.totalorder %v126, %v120
    %v129 = vsel %vm127, 1.0, 0.0
    %v130 = vsel %vm128, 1.0, 0.0
    %v131 = vpack.c.bf16 %v130, %v129
    %v140 = vunpack.c.l.b16 %v79
    %v141 = vunpack.c.l.b16 %v80
    %v142 = vunpack.c.l.b16 %v81
    %v143 = vunpack.c.l.b16 %v82
    %v144 = vunpack.c.l.b16 %v83
    %v145 = vunpack.c.l.b16 %v84
    %v146 = vunpack.c.l.b16 %v85
    %v147 = vunpack.c.l.b16 %v86
    %v148 = vpack.c.b16 %v141, %v140
    %v149 = vpack.c.b16 %v143, %v142
    %v150 = vpack.c.b16 %v145, %v144
    %v151 = vpack.c.b16 %v147, %v146
    %vm156 = vcmask 523264
    %v158 = vsel %vm156, %v131, 0
    %160 = vmatprep.subr.bf16.mxu0 0
    %161 = vmatpush1.bf16.msra.mxu0 0
    %162 = vmatprep.subr.bf16.mxu0 0
    %163 = vmatpush1.bf16.msra.mxu0 0
    %164 = vmatprep.subr.bf16.mxu0 0
    %165 = vmatpush1.bf16.msra.mxu0 0
    %166 = vmatprep.subr.bf16.mxu0 0
    %167 = vmatpush1.bf16.msra.mxu0 0
    %168 = vmatprep.subr.bf16.mxu0 0
    %169 = vmatpush1.bf16.msra.mxu0 %v151
    %170 = vmatprep.subr.bf16.mxu0 0
    %171 = vmatpush1.bf16.msra.mxu0 %v150
    %172 = vmatprep.subr.bf16.mxu0 0
    %173 = vmatpush1.bf16.msra.mxu0 %v149
    %174 = vmatprep.subr.bf16.mxu0 0
    %175 = vmatpush1.bf16.msra.mxu0 %v148
    %176 = vmatprep.subr.bf16.mxu0 0
    %177 = vmatpush2.bf16.msra.mxu0 0
    %178 = vmatprep.subr.bf16.mxu0 0
    %179 = vmatpush2.bf16.msra.mxu0 0
    %180 = vmatprep.subr.bf16.mxu0 0
    %181 = vmatpush2.bf16.msra.mxu0 0
    %182 = vmatprep.subr.bf16.mxu0 0
    %183 = vmatpush2.bf16.msra.mxu0 0
    %184 = vmatprep.subr.bf16.mxu0 0
    %185 = vmatpush2.bf16.msra.mxu0 0
    %186 = vmatprep.subr.bf16.mxu0 0
    %187 = vmatpush2.bf16.msra.mxu0 0
    %188 = vmatprep.subr.bf16.mxu0 0
    %189 = vmatpush2.bf16.msra.mxu0 0
    %190 = vmatprep.subr.bf16.mxu0 0
    %191 = vmatpush2.bf16.msra.mxu0 0
    %192 = vmatprep.mubr.bf16.mxu0 0
    %193 = vmatmul.mubr.bf16.gmra.mxu0 %v158
    %v194 = vpop.f32.mrf.mxu0
    %v195 = vadd.f32 0.0, %v194
    %v196 = vpop.f32.mrf.mxu0
    %v197 = vpop.f32.mrf.mxu0
    %v198 = vadd.f32 0.0, %v197
    %v199 = vpop.f32.mrf.mxu0
    %200 = vdwg.mxu0
    %v201 = vld [vmem:[%s1] sm:$0xff]
    %v202 = vld [vmem:[%s1 + $0x8] sm:$0xff]
    %204 = vset.pattern.permute.xlu0 0
    %205 = vperm.xlu0 %204, %v201
    %v206 = vpop.permute.xlu0 %205
    %209 = vset.pattern.permute.xlu0 0
    %210 = vperm.xlu0 %209, %v202
    %v211 = vpop.permute.xlu0 %210
    %v213 = vmul.f32 %v195, %v206
    %v214 = vmul.f32 %v198, %v211
    %vm215 = vcmask 261120
    %v216 = vsel %vm215, %v213, 0.0
    %v217 = vrot.slane %v216, 4
    %v218 = vadd.f32 %v216, %v217
    %v219 = vrot.slane %v218, 2
    %v220 = vadd.f32 %v218, %v219
    %v221 = vrot.slane %v220, 1
    %v222 = vadd.f32 %v220, %v221
    %v223 = vsel %vm215, %v214, 0.0
    %v224 = vrot.slane %v223, 4
    %v225 = vadd.f32 %v223, %v224
    %v226 = vrot.slane %v225, 2
    %v227 = vadd.f32 %v225, %v226
    %v228 = vrot.slane %v227, 1
    %v229 = vadd.f32 %v227, %v228
    %v230 = vld [vmem:[%s2] sm:$0x3]
    %232 = vset.pattern.permute.xlu0 0
    %233 = vperm.xlu0 %232, %v230
    %v234 = vpop.permute.xlu0 %233
    %v235 = vrot.slane %v234, 1
    %v238 = vmul.f32 %v222, %v234
    %v239 = vmul.f32 %v229, %v235
    %v240 = vpack.c.bf16 %v238, %v238
    %v241 = vpack.c.bf16 %v239, %v239
    %v243 = vlaneseq
    %v244 = vshrl.u32 %v243, 7
    %v245 = vsub.s32 0, %v244
    %v246 = vrot.slane %v91, %v245
    %v250 = vunpack.c.l.b16 %v240
    %v251 = vunpack.c.l.b16 %v241
    %v252 = vrot.slane %v251, 7
    %vm253 = vcmask 1041409
    %v254 = vsel %vm253, %v252, %v250
    %v255 = vpack.c.b16 %v254, %v254
    %v260 = vunpack.c.l.b16 %v87
    %v261 = vunpack.c.l.b16 %v88
    %v262 = vunpack.c.l.b16 %v89
    %v263 = vunpack.c.l.b16 %v90
    %v264 = vpack.c.b16 %v261, %v260
    %v265 = vpack.c.b16 %v263, %v262
    %v269 = vsel %vm215, %v255, 0
    %271 = vmatprep.subr.bf16.mxu0 0
    %272 = vmatpush1.bf16.msra.mxu0 0
    %273 = vmatprep.subr.bf16.mxu0 0
    %274 = vmatpush1.bf16.msra.mxu0 0
    %275 = vmatprep.subr.bf16.mxu0 0
    %276 = vmatpush1.bf16.msra.mxu0 0
    %277 = vmatprep.subr.bf16.mxu0 0
    %278 = vmatpush1.bf16.msra.mxu0 0
    %279 = vmatprep.subr.bf16.mxu0 0
    %280 = vmatpush1.bf16.msra.mxu0 0
    %281 = vmatprep.subr.bf16.mxu0 0
    %282 = vmatpush1.bf16.msra.mxu0 0
    %283 = vmatprep.subr.bf16.mxu0 0
    %284 = vmatpush1.bf16.msra.mxu0 %v265
    %285 = vmatprep.subr.bf16.mxu0 0
    %286 = vmatpush1.bf16.msra.mxu0 %v264
    %287 = vmatprep.subr.bf16.mxu0 0
    %288 = vmatpush2.bf16.msra.mxu0 0
    %289 = vmatprep.subr.bf16.mxu0 0
    %290 = vmatpush2.bf16.msra.mxu0 0
    %291 = vmatprep.subr.bf16.mxu0 0
    %292 = vmatpush2.bf16.msra.mxu0 0
    %293 = vmatprep.subr.bf16.mxu0 0
    %294 = vmatpush2.bf16.msra.mxu0 0
    %295 = vmatprep.subr.bf16.mxu0 0
    %296 = vmatpush2.bf16.msra.mxu0 0
    %297 = vmatprep.subr.bf16.mxu0 0
    %298 = vmatpush2.bf16.msra.mxu0 0
    %299 = vmatprep.subr.bf16.mxu0 0
    %300 = vmatpush2.bf16.msra.mxu0 0
    %301 = vmatprep.subr.bf16.mxu0 0
    %302 = vmatpush2.bf16.msra.mxu0 0
    %303 = vmatprep.mubr.bf16.mxu0 0
    %304 = vmatmul.mubr.bf16.gmra.mxu0 %v269
    %v305 = vpop.f32.mrf.mxu0
    %v306 = vadd.f32 %v246, %v305
    %v307 = vpop.f32.mrf.mxu0
    %v308 = vpop.f32.mrf.mxu0
    %v309 = vpop.f32.mrf.mxu0
    %310 = vdwg.mxu0
    %v311 = vtanh.pop %v306
    %v312 = vld [vmem:[%s3] sm:$0xff]
    %v313 = vld [vmem:[%s3 + $0x8] sm:$0xff]
    %v314 = vld [vmem:[%s3 + $0x10] sm:$0xff]
    %v315 = vld [vmem:[%s3 + $0x18] sm:$0xff]
    %316 = vset.pattern.permute.xlu0 0
    %317 = vperm.xlu0 %316, %v312
    %v318 = vpop.permute.xlu0 %317
    %319 = vset.pattern.permute.xlu0 0
    %320 = vperm.xlu0 %319, %v313
    %v321 = vpop.permute.xlu0 %320
    %322 = vset.pattern.permute.xlu0 0
    %323 = vperm.xlu0 %322, %v314
    %v324 = vpop.permute.xlu0 %323
    %325 = vset.pattern.permute.xlu0 0
    %326 = vperm.xlu0 %325, %v315
    %v327 = vpop.permute.xlu0 %326
    %vm328 = vcmp.eq.s32.totalorder %v318, %v120
    %vm329 = vcmp.eq.s32.totalorder %v321, %v120
    %vm330 = vcmp.eq.s32.totalorder %v324, %v120
    %vm331 = vcmp.eq.s32.totalorder %v327, %v120
    %v332 = vsel %vm328, 1.0, 0.0
    %v333 = vsel %vm329, 1.0, 0.0
    %v334 = vsel %vm330, 1.0, 0.0
    %v335 = vsel %vm331, 1.0, 0.0
    %v336 = vpack.c.bf16 %v333, %v332
    %v337 = vpack.c.bf16 %v335, %v334
    %v339 = vsel %vm156, %v336, 0
    %v342 = vsel %vm156, %v337, 0
    %344 = vmatprep.subr.bf16.mxu0 0
    %345 = vmatpush1.bf16.msra.mxu0 0
    %346 = vmatprep.subr.bf16.mxu0 0
    %347 = vmatpush1.bf16.msra.mxu0 0
    %348 = vmatprep.subr.bf16.mxu0 0
    %349 = vmatpush1.bf16.msra.mxu0 0
    %350 = vmatprep.subr.bf16.mxu0 0
    %351 = vmatpush1.bf16.msra.mxu0 0
    %352 = vmatprep.subr.bf16.mxu0 0
    %353 = vmatpush1.bf16.msra.mxu0 %v151
    %354 = vmatprep.subr.bf16.mxu0 0
    %355 = vmatpush1.bf16.msra.mxu0 %v150
    %356 = vmatprep.subr.bf16.mxu0 0
    %357 = vmatpush1.bf16.msra.mxu0 %v149
    %358 = vmatprep.subr.bf16.mxu0 0
    %359 = vmatpush1.bf16.msra.mxu0 %v148
    %360 = vmatprep.subr.bf16.mxu0 0
    %361 = vmatpush2.bf16.msra.mxu0 0
    %362 = vmatprep.subr.bf16.mxu0 0
    %363 = vmatpush2.bf16.msra.mxu0 0
    %364 = vmatprep.subr.bf16.mxu0 0
    %365 = vmatpush2.bf16.msra.mxu0 0
    %366 = vmatprep.subr.bf16.mxu0 0
    %367 = vmatpush2.bf16.msra.mxu0 0
    %368 = vmatprep.subr.bf16.mxu0 0
    %369 = vmatpush2.bf16.msra.mxu0 0
    %370 = vmatprep.subr.bf16.mxu0 0
    %371 = vmatpush2.bf16.msra.mxu0 0
    %372 = vmatprep.subr.bf16.mxu0 0
    %373 = vmatpush2.bf16.msra.mxu0 0
    %374 = vmatprep.subr.bf16.mxu0 0
    %375 = vmatpush2.bf16.msra.mxu0 0
    %376 = vmatprep.mubr.bf16.mxu0 0
    %377 = vmatmul.mubr.bf16.gmra.mxu0 %v339
    %v378 = vpop.f32.mrf.mxu0
    %v379 = vadd.f32 0.0, %v378
    %v380 = vpop.f32.mrf.mxu0
    %v381 = vpop.f32.mrf.mxu0
    %v382 = vadd.f32 0.0, %v381
    %v383 = vpop.f32.mrf.mxu0
    %384 = vmatprep.mubr.bf16.mxu0 0
    %385 = vmatmul.mubr.bf16.gmra.mxu0 %v342
    %v386 = vpop.f32.mrf.mxu0
    %v387 = vadd.f32 0.0, %v386
    %v388 = vpop.f32.mrf.mxu0
    %v389 = vpop.f32.mrf.mxu0
    %v390 = vadd.f32 0.0, %v389
    %v391 = vpop.f32.mrf.mxu0
    %392 = vdwg.mxu0
    %v393 = vld [vmem:[%s4] sm:$0xff]
    %v394 = vld [vmem:[%s4 + $0x8] sm:$0xff]
    %v395 = vld [vmem:[%s4 + $0x10] sm:$0xff]
    %v396 = vld [vmem:[%s4 + $0x18] sm:$0xff]
    %398 = vset.pattern.permute.xlu0 0
    %399 = vperm.xlu0 %398, %v393
    %v400 = vpop.permute.xlu0 %399
    %403 = vset.pattern.permute.xlu0 0
    %404 = vperm.xlu0 %403, %v394
    %v405 = vpop.permute.xlu0 %404
    %408 = vset.pattern.permute.xlu0 0
    %409 = vperm.xlu0 %408, %v395
    %v410 = vpop.permute.xlu0 %409
    %413 = vset.pattern.permute.xlu0 0
    %414 = vperm.xlu0 %413, %v396
    %v415 = vpop.permute.xlu0 %414
    %v417 = vmul.f32 %v379, %v400
    %v418 = vmul.f32 %v382, %v405
    %v419 = vmul.f32 %v387, %v410
    %v420 = vmul.f32 %v390, %v415
    %v421 = vsel %vm215, %v417, 0.0
    %v422 = vrot.slane %v421, 4
    %v423 = vadd.f32 %v421, %v422
    %v424 = vrot.slane %v423, 2
    %v425 = vadd.f32 %v423, %v424
    %v426 = vrot.slane %v425, 1
    %v427 = vadd.f32 %v425, %v426
    %v428 = vsel %vm215, %v418, 0.0
    %v429 = vrot.slane %v428, 4
    %v430 = vadd.f32 %v428, %v429
    %v431 = vrot.slane %v430, 2
    %v432 = vadd.f32 %v430, %v431
    %v433 = vrot.slane %v432, 1
    %v434 = vadd.f32 %v432, %v433
    %v435 = vsel %vm215, %v419, 0.0
    %v436 = vrot.slane %v435, 4
    %v437 = vadd.f32 %v435, %v436
    %v438 = vrot.slane %v437, 2
    %v439 = vadd.f32 %v437, %v438
    %v440 = vrot.slane %v439, 1
    %v441 = vadd.f32 %v439, %v440
    %v442 = vsel %vm215, %v420, 0.0
    %v443 = vrot.slane %v442, 4
    %v444 = vadd.f32 %v442, %v443
    %v445 = vrot.slane %v444, 2
    %v446 = vadd.f32 %v444, %v445
    %v447 = vrot.slane %v446, 1
    %v448 = vadd.f32 %v446, %v447
    %v449 = vld [vmem:[%s5] sm:$0xf]
    %451 = vset.pattern.permute.xlu0 0
    %452 = vperm.xlu0 %451, %v449
    %v453 = vpop.permute.xlu0 %452
    %v454 = vrot.slane %v453, 1
    %v455 = vrot.slane %v453, 2
    %v456 = vrot.slane %v453, 3
    %v461 = vmul.f32 %v427, %v453
    %v462 = vmul.f32 %v434, %v454
    %v463 = vmul.f32 %v441, %v455
    %v464 = vmul.f32 %v448, %v456
    %v465 = vpack.c.bf16 %v461, %v461
    %v466 = vpack.c.bf16 %v462, %v462
    %v467 = vpack.c.bf16 %v463, %v463
    %v468 = vpack.c.bf16 %v464, %v464
    %v473 = vunpack.c.l.b16 %v465
    %v474 = vunpack.c.l.b16 %v466
    %v475 = vunpack.c.l.b16 %v467
    %v476 = vunpack.c.l.b16 %v468
    %v477 = vrot.slane %v474, 7
    %v478 = vsel %vm253, %v477, %v473
    %v479 = vrot.slane %v475, 6
    %vm480 = vcmask 1042434
    %v481 = vsel %vm480, %v479, %v478
    %v482 = vrot.slane %v476, 5
    %vm483 = vcmask 1043459
    %v484 = vsel %vm483, %v482, %v481
    %v485 = vpack.c.b16 %v484, %v484
    %v487 = vsel %vm215, %v485, 0
    %489 = vmatprep.subr.bf16.mxu0 0
    %490 = vmatpush1.bf16.msra.mxu0 0
    %491 = vmatprep.subr.bf16.mxu0 0
    %492 = vmatpush1.bf16.msra.mxu0 0
    %493 = vmatprep.subr.bf16.mxu0 0
    %494 = vmatpush1.bf16.msra.mxu0 0
    %495 = vmatprep.subr.bf16.mxu0 0
    %496 = vmatpush1.bf16.msra.mxu0 0
    %497 = vmatprep.subr.bf16.mxu0 0
    %498 = vmatpush1.bf16.msra.mxu0 0
    %499 = vmatprep.subr.bf16.mxu0 0
    %500 = vmatpush1.bf16.msra.mxu0 0
    %501 = vmatprep.subr.bf16.mxu0 0
    %502 = vmatpush1.bf16.msra.mxu0 %v265
    %503 = vmatprep.subr.bf16.mxu0 0
    %504 = vmatpush1.bf16.msra.mxu0 %v264
    %505 = vmatprep.subr.bf16.mxu0 0
    %506 = vmatpush2.bf16.msra.mxu0 0
    %507 = vmatprep.subr.bf16.mxu0 0
    %508 = vmatpush2.bf16.msra.mxu0 0
    %509 = vmatprep.subr.bf16.mxu0 0
    %510 = vmatpush2.bf16.msra.mxu0 0
    %511 = vmatprep.subr.bf16.mxu0 0
    %512 = vmatpush2.bf16.msra.mxu0 0
    %513 = vmatprep.subr.bf16.mxu0 0
    %514 = vmatpush2.bf16.msra.mxu0 0
    %515 = vmatprep.subr.bf16.mxu0 0
    %516 = vmatpush2.bf16.msra.mxu0 0
    %517 = vmatprep.subr.bf16.mxu0 0
    %518 = vmatpush2.bf16.msra.mxu0 0
    %519 = vmatprep.subr.bf16.mxu0 0
    %520 = vmatpush2.bf16.msra.mxu0 0
    %521 = vmatprep.mubr.bf16.mxu0 0
    %522 = vmatmul.mubr.bf16.gmra.mxu0 %v487
    %v523 = vpop.f32.mrf.mxu0
    %v524 = vadd.f32 %v246, %v523
    %v525 = vpop.f32.mrf.mxu0
    %v526 = vpop.f32.mrf.mxu0
    %v527 = vpop.f32.mrf.mxu0
    %528 = vdwg.mxu0
    %v529 = vtanh.pop %v524
    %v530 = vpack.c.bf16 %v311, %v311
    %v532 = vlaneseq
    %v533 = vshrl.u32 %v532, 7
    %v534 = vsub.s32 0, %v533
    %v535 = vrot.slane %v115, %v534
    %v541 = vunpack.c.l.b16 %v111
    %v542 = vunpack.c.l.b16 %v112
    %v543 = vunpack.c.l.b16 %v113
    %v544 = vunpack.c.l.b16 %v114
    %v545 = vpack.c.b16 %v542, %v541
    %v546 = vpack.c.b16 %v544, %v543
    %v550 = vsel %vm215, %v530, 0
    %552 = vmatprep.subr.bf16.mxu0 0
    %553 = vmatpush1.bf16.msra.mxu0 0
    %554 = vmatprep.subr.bf16.mxu0 0
    %555 = vmatpush1.bf16.msra.mxu0 0
    %556 = vmatprep.subr.bf16.mxu0 0
    %557 = vmatpush1.bf16.msra.mxu0 0
    %558 = vmatprep.subr.bf16.mxu0 0
    %559 = vmatpush1.bf16.msra.mxu0 0
    %560 = vmatprep.subr.bf16.mxu0 0
    %561 = vmatpush1.bf16.msra.mxu0 0
    %562 = vmatprep.subr.bf16.mxu0 0
    %563 = vmatpush1.bf16.msra.mxu0 0
    %564 = vmatprep.subr.bf16.mxu0 0
    %565 = vmatpush1.bf16.msra.mxu0 %v546
    %566 = vmatprep.subr.bf16.mxu0 0
    %567 = vmatpush1.bf16.msra.mxu0 %v545
    %568 = vmatprep.subr.bf16.mxu0 0
    %569 = vmatpush2.bf16.msra.mxu0 0
    %570 = vmatprep.subr.bf16.mxu0 0
    %571 = vmatpush2.bf16.msra.mxu0 0
    %572 = vmatprep.subr.bf16.mxu0 0
    %573 = vmatpush2.bf16.msra.mxu0 0
    %574 = vmatprep.subr.bf16.mxu0 0
    %575 = vmatpush2.bf16.msra.mxu0 0
    %576 = vmatprep.subr.bf16.mxu0 0
    %577 = vmatpush2.bf16.msra.mxu0 0
    %578 = vmatprep.subr.bf16.mxu0 0
    %579 = vmatpush2.bf16.msra.mxu0 0
    %580 = vmatprep.subr.bf16.mxu0 0
    %581 = vmatpush2.bf16.msra.mxu0 0
    %582 = vmatprep.subr.bf16.mxu0 0
    %583 = vmatpush2.bf16.msra.mxu0 0
    %584 = vmatprep.mubr.bf16.mxu0 0
    %585 = vmatmul.mubr.bf16.gmra.mxu0 %v550
    %v586 = vpop.f32.mrf.mxu0
    %v587 = vadd.f32 %v535, %v586
    %v588 = vpop.f32.mrf.mxu0
    %v589 = vpop.f32.mrf.mxu0
    %v590 = vpop.f32.mrf.mxu0
    %591 = vdwg.mxu0
    %v592 = vpack.c.bf16 %v587, %v587
    %v593 = vpack.c.bf16 %v529, %v529
    %v595 = vlaneseq
    %v596 = vshrl.u32 %v595, 7
    %v597 = vsub.s32 0, %v596
    %v598 = vrot.slane %v116, %v597
    %v601 = vsel %vm215, %v592, 0
    %v604 = vsel %vm215, %v593, 0
    %606 = vmatprep.subr.bf16.mxu0 0
    %607 = vmatpush1.bf16.xpose.msra.mxu0 0
    %608 = vmatprep.subr.bf16.mxu0 0
    %609 = vmatpush1.bf16.xpose.msra.mxu0 0
    %610 = vmatprep.subr.bf16.mxu0 0
    %611 = vmatpush1.bf16.xpose.msra.mxu0 0
    %612 = vmatprep.subr.bf16.mxu0 0
    %613 = vmatpush1.bf16.xpose.msra.mxu0 0
    %614 = vmatprep.subr.bf16.mxu0 0
    %615 = vmatpush1.bf16.xpose.msra.mxu0 0
    %616 = vmatprep.subr.bf16.mxu0 0
    %617 = vmatpush1.bf16.xpose.msra.mxu0 0
    %618 = vmatprep.subr.bf16.mxu0 0
    %619 = vmatpush1.bf16.xpose.msra.mxu0 0
    %620 = vmatprep.subr.bf16.mxu0 0
    %621 = vmatpush1.bf16.xpose.msra.mxu0 %v604
    %622 = vmatprep.subr.bf16.mxu0 0
    %623 = vmatpush2.bf16.xpose.msra.mxu0 0
    %624 = vmatprep.subr.bf16.mxu0 0
    %625 = vmatpush2.bf16.xpose.msra.mxu0 0
    %626 = vmatprep.subr.bf16.mxu0 0
    %627 = vmatpush2.bf16.xpose.msra.mxu0 0
    %628 = vmatprep.subr.bf16.mxu0 0
    %629 = vmatpush2.bf16.xpose.msra.mxu0 0
    %630 = vmatprep.subr.bf16.mxu0 0
    %631 = vmatpush2.bf16.xpose.msra.mxu0 0
    %632 = vmatprep.subr.bf16.mxu0 0
    %633 = vmatpush2.bf16.xpose.msra.mxu0 0
    %634 = vmatprep.subr.bf16.mxu0 0
    %635 = vmatpush2.bf16.xpose.msra.mxu0 0
    %636 = vmatprep.subr.bf16.mxu0 0
    %637 = vmatpush2.bf16.xpose.msra.mxu0 0
    %638 = vmatprep.mubr.bf16.mxu0 0
    %639 = vmatmul.mubr.bf16.gmra.mxu0 %v601
    %v640 = vpop.f32.mrf.mxu0
    %v641 = vadd.f32 %v598, %v640
    %v642 = vpop.f32.mrf.mxu0
    %v643 = vpop.f32.mrf.mxu0
    %v644 = vpop.f32.mrf.mxu0
    %645 = vdwg.mxu0
    %v646 = vld [vmem:[%s8] sm:$0xff]
    %v647 = vld [vmem:[%s8 + $0x8] sm:$0xff]
    %v648 = vld [vmem:[%s8 + $0x10] sm:$0xff]
    %v649 = vld [vmem:[%s8 + $0x18] sm:$0xff]
    %650 = vset.pattern.permute.xlu0 0
    %651 = vperm.xlu0 %650, %v646
    %v652 = vpop.permute.xlu0 %651
    %653 = vset.pattern.permute.xlu0 0
    %654 = vperm.xlu0 %653, %v647
    %v655 = vpop.permute.xlu0 %654
    %656 = vset.pattern.permute.xlu0 0
    %657 = vperm.xlu0 %656, %v648
    %v658 = vpop.permute.xlu0 %657
    %659 = vset.pattern.permute.xlu0 0
    %660 = vperm.xlu0 %659, %v649
    %v661 = vpop.permute.xlu0 %660
    %vm662 = vcmp.eq.s32.totalorder %v652, %v120
    %vm663 = vcmp.eq.s32.totalorder %v655, %v120
    %vm664 = vcmp.eq.s32.totalorder %v658, %v120
    %vm665 = vcmp.eq.s32.totalorder %v661, %v120
    %v666 = vsel %vm662, 1.0, 0.0
    %v667 = vsel %vm663, 1.0, 0.0
    %v668 = vsel %vm664, 1.0, 0.0
    %v669 = vsel %vm665, 1.0, 0.0
    %v670 = vpack.c.bf16 %v667, %v666
    %v671 = vpack.c.bf16 %v669, %v668
    %v676 = vunpack.c.l.b16 %v92
    %v677 = vunpack.c.l.b16 %v93
    %v678 = vunpack.c.l.b16 %v94
    %v679 = vunpack.c.l.b16 %v95
    %v680 = vpack.c.b16 %v677, %v676
    %v681 = vpack.c.b16 %v679, %v678
    %v685 = vsel %vm215, %v670, 0
    %v688 = vsel %vm215, %v671, 0
    %690 = vmatprep.subr.bf16.mxu0 0
    %691 = vmatpush1.bf16.msra.mxu0 0
    %692 = vmatprep.subr.bf16.mxu0 0
    %693 = vmatpush1.bf16.msra.mxu0 0
    %694 = vmatprep.subr.bf16.mxu0 0
    %695 = vmatpush1.bf16.msra.mxu0 0
    %696 = vmatprep.subr.bf16.mxu0 0
    %697 = vmatpush1.bf16.msra.mxu0 0
    %698 = vmatprep.subr.bf16.mxu0 0
    %699 = vmatpush1.bf16.msra.mxu0 0
    %700 = vmatprep.subr.bf16.mxu0 0
    %701 = vmatpush1.bf16.msra.mxu0 0
    %702 = vmatprep.subr.bf16.mxu0 0
    %703 = vmatpush1.bf16.msra.mxu0 %v681
    %704 = vmatprep.subr.bf16.mxu0 0
    %705 = vmatpush1.bf16.msra.mxu0 %v680
    %706 = vmatprep.subr.bf16.mxu0 0
    %707 = vmatpush2.bf16.msra.mxu0 0
    %708 = vmatprep.subr.bf16.mxu0 0
    %709 = vmatpush2.bf16.msra.mxu0 0
    %710 = vmatprep.subr.bf16.mxu0 0
    %711 = vmatpush2.bf16.msra.mxu0 0
    %712 = vmatprep.subr.bf16.mxu0 0
    %713 = vmatpush2.bf16.msra.mxu0 0
    %714 = vmatprep.subr.bf16.mxu0 0
    %715 = vmatpush2.bf16.msra.mxu0 0
    %716 = vmatprep.subr.bf16.mxu0 0
    %717 = vmatpush2.bf16.msra.mxu0 0
    %718 = vmatprep.subr.bf16.mxu0 0
    %719 = vmatpush2.bf16.msra.mxu0 0
    %720 = vmatprep.subr.bf16.mxu0 0
    %721 = vmatpush2.bf16.msra.mxu0 0
    %722 = vmatprep.mubr.bf16.mxu0 0
    %723 = vmatmul.mubr.bf16.gmra.mxu0 %v685
    %v724 = vpop.f32.mrf.mxu0
    %v725 = vadd.f32 0.0, %v724
    %v726 = vpop.f32.mrf.mxu0
    %v727 = vpop.f32.mrf.mxu0
    %v728 = vadd.f32 0.0, %v727
    %v729 = vpop.f32.mrf.mxu0
    %730 = vmatprep.mubr.bf16.mxu0 0
    %731 = vmatmul.mubr.bf16.gmra.mxu0 %v688
    %v732 = vpop.f32.mrf.mxu0
    %v733 = vadd.f32 0.0, %v732
    %v734 = vpop.f32.mrf.mxu0
    %v735 = vpop.f32.mrf.mxu0
    %v736 = vadd.f32 0.0, %v735
    %v737 = vpop.f32.mrf.mxu0
    %738 = vdwg.mxu0
    %v739 = vsel %vm215, %v725, 0.0
    %v740 = vrot.slane %v739, 4
    %v741 = vadd.f32 %v739, %v740
    %v742 = vrot.slane %v741, 2
    %v743 = vadd.f32 %v741, %v742
    %v744 = vrot.slane %v743, 1
    %v745 = vadd.f32 %v743, %v744
    %v746 = vsel %vm215, %v728, 0.0
    %v747 = vrot.slane %v746, 4
    %v748 = vadd.f32 %v746, %v747
    %v749 = vrot.slane %v748, 2
    %v750 = vadd.f32 %v748, %v749
    %v751 = vrot.slane %v750, 1
    %v752 = vadd.f32 %v750, %v751
    %v753 = vsel %vm215, %v733, 0.0
    %v754 = vrot.slane %v753, 4
    %v755 = vadd.f32 %v753, %v754
    %v756 = vrot.slane %v755, 2
    %v757 = vadd.f32 %v755, %v756
    %v758 = vrot.slane %v757, 1
    %v759 = vadd.f32 %v757, %v758
    %v760 = vsel %vm215, %v736, 0.0
    %v761 = vrot.slane %v760, 4
    %v762 = vadd.f32 %v760, %v761
    %v763 = vrot.slane %v762, 2
    %v764 = vadd.f32 %v762, %v763
    %v765 = vrot.slane %v764, 1
    %v766 = vadd.f32 %v764, %v765
    %v767 = vmul.f32 %v745, 0.16666667
    %v768 = vmul.f32 %v752, 0.16666667
    %v769 = vmul.f32 %v759, 0.16666667
    %v770 = vmul.f32 %v766, 0.16666667
    %v771 = vld [vmem:[%s9] sm:$0xff]
    %v772 = vld [vmem:[%s9 + $0x8] sm:$0xff]
    %v773 = vld [vmem:[%s9 + $0x10] sm:$0xff]
    %v774 = vld [vmem:[%s9 + $0x18] sm:$0xff]
    %775 = vset.pattern.permute.xlu0 0
    %776 = vperm.xlu0 %775, %v771
    %v777 = vpop.permute.xlu0 %776
    %778 = vset.pattern.permute.xlu0 0
    %779 = vperm.xlu0 %778, %v772
    %v780 = vpop.permute.xlu0 %779
    %781 = vset.pattern.permute.xlu0 0
    %782 = vperm.xlu0 %781, %v773
    %v783 = vpop.permute.xlu0 %782
    %784 = vset.pattern.permute.xlu0 0
    %785 = vperm.xlu0 %784, %v774
    %v786 = vpop.permute.xlu0 %785
    %vm787 = vcmp.eq.s32.totalorder %v777, %v120
    %vm788 = vcmp.eq.s32.totalorder %v780, %v120
    %vm789 = vcmp.eq.s32.totalorder %v783, %v120
    %vm790 = vcmp.eq.s32.totalorder %v786, %v120
    %v791 = vsel %vm787, 1.0, 0.0
    %v792 = vsel %vm788, 1.0, 0.0
    %v793 = vsel %vm789, 1.0, 0.0
    %v794 = vsel %vm790, 1.0, 0.0
    %v795 = vpack.c.bf16 %v792, %v791
    %v796 = vpack.c.bf16 %v794, %v793
    %v799 = vunpack.c.l.b16 %v96
    %v800 = vunpack.c.l.b16 %v97
    %v801 = vpack.c.b16 %v800, %v799
    %vm803 = vcmask 130048
    %v805 = vsel %vm803, %v795, 0
    %v808 = vsel %vm803, %v796, 0
    %810 = vmatprep.subr.bf16.mxu0 0
    %811 = vmatpush1.bf16.msra.mxu0 0
    %812 = vmatprep.subr.bf16.mxu0 0
    %813 = vmatpush1.bf16.msra.mxu0 0
    %814 = vmatprep.subr.bf16.mxu0 0
    %815 = vmatpush1.bf16.msra.mxu0 0
    %816 = vmatprep.subr.bf16.mxu0 0
    %817 = vmatpush1.bf16.msra.mxu0 0
    %818 = vmatprep.subr.bf16.mxu0 0
    %819 = vmatpush1.bf16.msra.mxu0 0
    %820 = vmatprep.subr.bf16.mxu0 0
    %821 = vmatpush1.bf16.msra.mxu0 0
    %822 = vmatprep.subr.bf16.mxu0 0
    %823 = vmatpush1.bf16.msra.mxu0 0
    %824 = vmatprep.subr.bf16.mxu0 0
    %825 = vmatpush1.bf16.msra.mxu0 %v801
    %826 = vmatprep.subr.bf16.mxu0 0
    %827 = vmatpush2.bf16.msra.mxu0 0
    %828 = vmatprep.subr.bf16.mxu0 0
    %829 = vmatpush2.bf16.msra.mxu0 0
    %830 = vmatprep.subr.bf16.mxu0 0
    %831 = vmatpush2.bf16.msra.mxu0 0
    %832 = vmatprep.subr.bf16.mxu0 0
    %833 = vmatpush2.bf16.msra.mxu0 0
    %834 = vmatprep.subr.bf16.mxu0 0
    %835 = vmatpush2.bf16.msra.mxu0 0
    %836 = vmatprep.subr.bf16.mxu0 0
    %837 = vmatpush2.bf16.msra.mxu0 0
    %838 = vmatprep.subr.bf16.mxu0 0
    %839 = vmatpush2.bf16.msra.mxu0 0
    %840 = vmatprep.subr.bf16.mxu0 0
    %841 = vmatpush2.bf16.msra.mxu0 0
    %842 = vmatprep.mubr.bf16.mxu0 0
    %843 = vmatmul.mubr.bf16.gmra.mxu0 %v805
    %v844 = vpop.f32.mrf.mxu0
    %v845 = vadd.f32 0.0, %v844
    %v846 = vpop.f32.mrf.mxu0
    %v847 = vpop.f32.mrf.mxu0
    %v848 = vadd.f32 0.0, %v847
    %v849 = vpop.f32.mrf.mxu0
    %850 = vmatprep.mubr.bf16.mxu0 0
    %851 = vmatmul.mubr.bf16.gmra.mxu0 %v808
    %v852 = vpop.f32.mrf.mxu0
    %v853 = vadd.f32 0.0, %v852
    %v854 = vpop.f32.mrf.mxu0
    %v855 = vpop.f32.mrf.mxu0
    %v856 = vadd.f32 0.0, %v855
    %v857 = vpop.f32.mrf.mxu0
    %858 = vdwg.mxu0
    %v859 = vsel %vm215, %v845, 0.0
    %v860 = vrot.slane %v859, 4
    %v861 = vadd.f32 %v859, %v860
    %v862 = vrot.slane %v861, 2
    %v863 = vadd.f32 %v861, %v862
    %v864 = vrot.slane %v863, 1
    %v865 = vadd.f32 %v863, %v864
    %v866 = vsel %vm215, %v848, 0.0
    %v867 = vrot.slane %v866, 4
    %v868 = vadd.f32 %v866, %v867
    %v869 = vrot.slane %v868, 2
    %v870 = vadd.f32 %v868, %v869
    %v871 = vrot.slane %v870, 1
    %v872 = vadd.f32 %v870, %v871
    %v873 = vsel %vm215, %v853, 0.0
    %v874 = vrot.slane %v873, 4
    %v875 = vadd.f32 %v873, %v874
    %v876 = vrot.slane %v875, 2
    %v877 = vadd.f32 %v875, %v876
    %v878 = vrot.slane %v877, 1
    %v879 = vadd.f32 %v877, %v878
    %v880 = vsel %vm215, %v856, 0.0
    %v881 = vrot.slane %v880, 4
    %v882 = vadd.f32 %v880, %v881
    %v883 = vrot.slane %v882, 2
    %v884 = vadd.f32 %v882, %v883
    %v885 = vrot.slane %v884, 1
    %v886 = vadd.f32 %v884, %v885
    %v887 = vmul.f32 %v865, 0.2
    %v888 = vmul.f32 %v872, 0.2
    %v889 = vmul.f32 %v879, 0.2
    %v890 = vmul.f32 %v886, 0.2
    %v891 = vpack.c.bf16 %v767, %v767
    %v892 = vpack.c.bf16 %v768, %v768
    %v893 = vpack.c.bf16 %v769, %v769
    %v894 = vpack.c.bf16 %v770, %v770
    %v895 = vpack.c.bf16 %v887, %v887
    %v896 = vpack.c.bf16 %v888, %v888
    %v897 = vpack.c.bf16 %v889, %v889
    %v898 = vpack.c.bf16 %v890, %v890
    %v903 = vunpack.c.l.b16 %v895
    %v904 = vunpack.c.l.b16 %v896
    %v905 = vunpack.c.l.b16 %v897
    %v906 = vunpack.c.l.b16 %v898
    %v907 = vsel %vm253, %v904, %v903
    %v908 = vsel %vm480, %v905, %v907
    %v909 = vsel %vm483, %v906, %v908
    %v910 = vpack.c.b16 %v909, %v909
    %v915 = vunpack.c.l.b16 %v102
    %v916 = vunpack.c.l.b16 %v103
    %v917 = vunpack.c.l.b16 %v104
    %v918 = vunpack.c.l.b16 %v105
    %v919 = vpack.c.b16 %v916, %v915
    %v920 = vpack.c.b16 %v918, %v917
    %v924 = vsel %vm215, %v910, 0
    %926 = vmatprep.subr.bf16.mxu0 0
    %927 = vmatpush1.bf16.msra.mxu0 0
    %928 = vmatprep.subr.bf16.mxu0 0
    %929 = vmatpush1.bf16.msra.mxu0 0
    %930 = vmatprep.subr.bf16.mxu0 0
    %931 = vmatpush1.bf16.msra.mxu0 0
    %932 = vmatprep.subr.bf16.mxu0 0
    %933 = vmatpush1.bf16.msra.mxu0 0
    %934 = vmatprep.subr.bf16.mxu0 0
    %935 = vmatpush1.bf16.msra.mxu0 0
    %936 = vmatprep.subr.bf16.mxu0 0
    %937 = vmatpush1.bf16.msra.mxu0 0
    %938 = vmatprep.subr.bf16.mxu0 0
    %939 = vmatpush1.bf16.msra.mxu0 %v920
    %940 = vmatprep.subr.bf16.mxu0 0
    %941 = vmatpush1.bf16.msra.mxu0 %v919
    %942 = vmatprep.subr.bf16.mxu0 0
    %943 = vmatpush2.bf16.msra.mxu0 0
    %944 = vmatprep.subr.bf16.mxu0 0
    %945 = vmatpush2.bf16.msra.mxu0 0
    %946 = vmatprep.subr.bf16.mxu0 0
    %947 = vmatpush2.bf16.msra.mxu0 0
    %948 = vmatprep.subr.bf16.mxu0 0
    %949 = vmatpush2.bf16.msra.mxu0 0
    %950 = vmatprep.subr.bf16.mxu0 0
    %951 = vmatpush2.bf16.msra.mxu0 0
    %952 = vmatprep.subr.bf16.mxu0 0
    %953 = vmatpush2.bf16.msra.mxu0 0
    %954 = vmatprep.subr.bf16.mxu0 0
    %955 = vmatpush2.bf16.msra.mxu0 0
    %956 = vmatprep.subr.bf16.mxu0 0
    %957 = vmatpush2.bf16.msra.mxu0 0
    %958 = vmatprep.mubr.bf16.mxu0 0
    %959 = vmatmul.mubr.bf16.gmra.mxu0 %v924
    %v960 = vpop.f32.mrf.mxu0
    %v961 = vadd.f32 0.0, %v960
    %v962 = vpop.f32.mrf.mxu0
    %v963 = vpop.f32.mrf.mxu0
    %v964 = vpop.f32.mrf.mxu0
    %965 = vdwg.mxu0
    %v970 = vunpack.c.l.b16 %v891
    %v971 = vunpack.c.l.b16 %v892
    %v972 = vunpack.c.l.b16 %v893
    %v973 = vunpack.c.l.b16 %v894
    %v974 = vsel %vm253, %v971, %v970
    %v975 = vsel %vm480, %v972, %v974
    %v976 = vsel %vm483, %v973, %v975
    %v977 = vpack.c.b16 %v976, %v976
    %v982 = vunpack.c.l.b16 %v98
    %v983 = vunpack.c.l.b16 %v99
    %v984 = vunpack.c.l.b16 %v100
    %v985 = vunpack.c.l.b16 %v101
    %v986 = vpack.c.b16 %v983, %v982
    %v987 = vpack.c.b16 %v985, %v984
    %v991 = vsel %vm215, %v977, 0
    %993 = vmatprep.subr.bf16.mxu0 0
    %994 = vmatpush1.bf16.msra.mxu0 0
    %995 = vmatprep.subr.bf16.mxu0 0
    %996 = vmatpush1.bf16.msra.mxu0 0
    %997 = vmatprep.subr.bf16.mxu0 0
    %998 = vmatpush1.bf16.msra.mxu0 0
    %999 = vmatprep.subr.bf16.mxu0 0
    %1000 = vmatpush1.bf16.msra.mxu0 0
    %1001 = vmatprep.subr.bf16.mxu0 0
    %1002 = vmatpush1.bf16.msra.mxu0 0
    %1003 = vmatprep.subr.bf16.mxu0 0
    %1004 = vmatpush1.bf16.msra.mxu0 0
    %1005 = vmatprep.subr.bf16.mxu0 0
    %1006 = vmatpush1.bf16.msra.mxu0 %v987
    %1007 = vmatprep.subr.bf16.mxu0 0
    %1008 = vmatpush1.bf16.msra.mxu0 %v986
    %1009 = vmatprep.subr.bf16.mxu0 0
    %1010 = vmatpush2.bf16.msra.mxu0 0
    %1011 = vmatprep.subr.bf16.mxu0 0
    %1012 = vmatpush2.bf16.msra.mxu0 0
    %1013 = vmatprep.subr.bf16.mxu0 0
    %1014 = vmatpush2.bf16.msra.mxu0 0
    %1015 = vmatprep.subr.bf16.mxu0 0
    %1016 = vmatpush2.bf16.msra.mxu0 0
    %1017 = vmatprep.subr.bf16.mxu0 0
    %1018 = vmatpush2.bf16.msra.mxu0 0
    %1019 = vmatprep.subr.bf16.mxu0 0
    %1020 = vmatpush2.bf16.msra.mxu0 0
    %1021 = vmatprep.subr.bf16.mxu0 0
    %1022 = vmatpush2.bf16.msra.mxu0 0
    %1023 = vmatprep.subr.bf16.mxu0 0
    %1024 = vmatpush2.bf16.msra.mxu0 0
    %1025 = vmatprep.mubr.bf16.mxu0 0
    %1026 = vmatmul.mubr.bf16.gmra.mxu0 %v991
    %v1027 = vpop.f32.mrf.mxu0
    %v1028 = vadd.f32 %v961, %v1027
    %v1029 = vpop.f32.mrf.mxu0
    %v1030 = vpop.f32.mrf.mxu0
    %v1031 = vpop.f32.mrf.mxu0
    %1032 = vdwg.mxu0
    %v1037 = vunpack.c.l.b16 %v106
    %v1038 = vunpack.c.l.b16 %v107
    %v1039 = vunpack.c.l.b16 %v108
    %v1040 = vunpack.c.l.b16 %v109
    %v1041 = vpack.c.b16 %v1038, %v1037
    %v1042 = vpack.c.b16 %v1040, %v1039
    %1045 = vmatprep.subr.bf16.mxu0 0
    %1046 = vmatpush1.bf16.msra.mxu0 0
    %1047 = vmatprep.subr.bf16.mxu0 0
    %1048 = vmatpush1.bf16.msra.mxu0 0
    %1049 = vmatprep.subr.bf16.mxu0 0
    %1050 = vmatpush1.bf16.msra.mxu0 0
    %1051 = vmatprep.subr.bf16.mxu0 0
    %1052 = vmatpush1.bf16.msra.mxu0 0
    %1053 = vmatprep.subr.bf16.mxu0 0
    %1054 = vmatpush1.bf16.msra.mxu0 0
    %1055 = vmatprep.subr.bf16.mxu0 0
    %1056 = vmatpush1.bf16.msra.mxu0 0
    %1057 = vmatprep.subr.bf16.mxu0 0
    %1058 = vmatpush1.bf16.msra.mxu0 %v1042
    %1059 = vmatprep.subr.bf16.mxu0 0
    %1060 = vmatpush1.bf16.msra.mxu0 %v1041
    %1061 = vmatprep.subr.bf16.mxu0 0
    %1062 = vmatpush2.bf16.msra.mxu0 0
    %1063 = vmatprep.subr.bf16.mxu0 0
    %1064 = vmatpush2.bf16.msra.mxu0 0
    %1065 = vmatprep.subr.bf16.mxu0 0
    %1066 = vmatpush2.bf16.msra.mxu0 0
    %1067 = vmatprep.subr.bf16.mxu0 0
    %1068 = vmatpush2.bf16.msra.mxu0 0
    %1069 = vmatprep.subr.bf16.mxu0 0
    %1070 = vmatpush2.bf16.msra.mxu0 0
    %1071 = vmatprep.subr.bf16.mxu0 0
    %1072 = vmatpush2.bf16.msra.mxu0 0
    %1073 = vmatprep.subr.bf16.mxu0 0
    %1074 = vmatpush2.bf16.msra.mxu0 0
    %1075 = vmatprep.subr.bf16.mxu0 0
    %1076 = vmatpush2.bf16.msra.mxu0 0
    %1077 = vmatprep.mubr.bf16.mxu0 0
    %1078 = vmatmul.mubr.bf16.gmra.mxu0 %v604
    %v1079 = vpop.f32.mrf.mxu0
    %v1080 = vadd.f32 0.0, %v1079
    %v1081 = vpop.f32.mrf.mxu0
    %v1082 = vpop.f32.mrf.mxu0
    %v1083 = vpop.f32.mrf.mxu0
    %1084 = vdwg.mxu0
    %v1085 = vadd.f32 %v1028, %v1080
    %v1087 = vlaneseq
    %v1088 = vshrl.u32 %v1087, 7
    %v1089 = vsub.s32 0, %v1088
    %v1090 = vrot.slane %v110, %v1089
    %v1092 = vadd.f32 %v1085, %v1090
    %v1093 = vtanh.pop %v1092
    %v1094 = vpack.c.bf16 %v1093, %v1093
    %v1096 = vsel %vm215, %v1094, 0
    %1098 = vmatprep.subr.bf16.mxu0 0
    %1099 = vmatpush1.bf16.xpose.msra.mxu0 0
    %1100 = vmatprep.subr.bf16.mxu0 0
    %1101 = vmatpush1.bf16.xpose.msra.mxu0 0
    %1102 = vmatprep.subr.bf16.mxu0 0
    %1103 = vmatpush1.bf16.xpose.msra.mxu0 0
    %1104 = vmatprep.subr.bf16.mxu0 0
    %1105 = vmatpush1.bf16.xpose.msra.mxu0 0
    %1106 = vmatprep.subr.bf16.mxu0 0
    %1107 = vmatpush1.bf16.xpose.msra.mxu0 0
    %1108 = vmatprep.subr.bf16.mxu0 0
    %1109 = vmatpush1.bf16.xpose.msra.mxu0 0
    %1110 = vmatprep.subr.bf16.mxu0 0
    %1111 = vmatpush1.bf16.xpose.msra.mxu0 0
    %1112 = vmatprep.subr.bf16.mxu0 0
    %1113 = vmatpush1.bf16.xpose.msra.mxu0 %v1096
    %1114 = vmatprep.subr.bf16.mxu0 0
    %1115 = vmatpush2.bf16.xpose.msra.mxu0 0
    %1116 = vmatprep.subr.bf16.mxu0 0
    %1117 = vmatpush2.bf16.xpose.msra.mxu0 0
    %1118 = vmatprep.subr.bf16.mxu0 0
    %1119 = vmatpush2.bf16.xpose.msra.mxu0 0
    %1120 = vmatprep.subr.bf16.mxu0 0
    %1121 = vmatpush2.bf16.xpose.msra.mxu0 0
    %1122 = vmatprep.subr.bf16.mxu0 0
    %1123 = vmatpush2.bf16.xpose.msra.mxu0 0
    %1124 = vmatprep.subr.bf16.mxu0 0
    %1125 = vmatpush2.bf16.xpose.msra.mxu0 0
    %1126 = vmatprep.subr.bf16.mxu0 0
    %1127 = vmatpush2.bf16.xpose.msra.mxu0 0
    %1128 = vmatprep.subr.bf16.mxu0 0
    %1129 = vmatpush2.bf16.xpose.msra.mxu0 0
    %1130 = vmatprep.mubr.bf16.mxu0 0
    %1131 = vmatmul.mubr.bf16.gmra.mxu0 %v601
    %v1132 = vpop.f32.mrf.mxu0
    %v1133 = vadd.f32 %v598, %v1132
    %v1134 = vpop.f32.mrf.mxu0
    %v1135 = vpop.f32.mrf.mxu0
    %v1136 = vpop.f32.mrf.mxu0
    %1137 = vdwg.mxu0
    %v1138 = vld [vmem:[%s6] sm:$0xff]
    %v1139 = vld [vmem:[%s6 + $0x8] sm:$0xff]
    %1140 = vset.pattern.permute.xlu0 0
    %1141 = vperm.xlu0 %1140, %v1138
    %v1142 = vpop.permute.xlu0 %1141
    %1143 = vset.pattern.permute.xlu0 0
    %1144 = vperm.xlu0 %1143, %v1139
    %v1145 = vpop.permute.xlu0 %1144
    %vm1146 = vcmp.eq.s32.totalorder %v1142, %v120
    %vm1147 = vcmp.eq.s32.totalorder %v1145, %v120
    %v1148 = vsel %vm1146, 1.0, 0.0
    %v1149 = vsel %vm1147, 1.0, 0.0
    %v1150 = vpack.c.bf16 %v1149, %v1148
    %v1152 = vsel %vm215, %v1150, 0
    %1154 = vmatprep.subr.bf16.mxu0 0
    %1155 = vmatpush1.bf16.msra.mxu0 0
    %1156 = vmatprep.subr.bf16.mxu0 0
    %1157 = vmatpush1.bf16.msra.mxu0 0
    %1158 = vmatprep.subr.bf16.mxu0 0
    %1159 = vmatpush1.bf16.msra.mxu0 0
    %1160 = vmatprep.subr.bf16.mxu0 0
    %1161 = vmatpush1.bf16.msra.mxu0 0
    %1162 = vmatprep.subr.bf16.mxu0 0
    %1163 = vmatpush1.bf16.msra.mxu0 0
    %1164 = vmatprep.subr.bf16.mxu0 0
    %1165 = vmatpush1.bf16.msra.mxu0 0
    %1166 = vmatprep.subr.bf16.mxu0 0
    %1167 = vmatpush1.bf16.msra.mxu0 %v681
    %1168 = vmatprep.subr.bf16.mxu0 0
    %1169 = vmatpush1.bf16.msra.mxu0 %v680
    %1170 = vmatprep.subr.bf16.mxu0 0
    %1171 = vmatpush2.bf16.msra.mxu0 0
    %1172 = vmatprep.subr.bf16.mxu0 0
    %1173 = vmatpush2.bf16.msra.mxu0 0
    %1174 = vmatprep.subr.bf16.mxu0 0
    %1175 = vmatpush2.bf16.msra.mxu0 0
    %1176 = vmatprep.subr.bf16.mxu0 0
    %1177 = vmatpush2.bf16.msra.mxu0 0
    %1178 = vmatprep.subr.bf16.mxu0 0
    %1179 = vmatpush2.bf16.msra.mxu0 0
    %1180 = vmatprep.subr.bf16.mxu0 0
    %1181 = vmatpush2.bf16.msra.mxu0 0
    %1182 = vmatprep.subr.bf16.mxu0 0
    %1183 = vmatpush2.bf16.msra.mxu0 0
    %1184 = vmatprep.subr.bf16.mxu0 0
    %1185 = vmatpush2.bf16.msra.mxu0 0
    %1186 = vmatprep.mubr.bf16.mxu0 0
    %1187 = vmatmul.mubr.bf16.gmra.mxu0 %v1152
    %v1188 = vpop.f32.mrf.mxu0
    %v1189 = vadd.f32 0.0, %v1188
    %v1190 = vpop.f32.mrf.mxu0
    %v1191 = vpop.f32.mrf.mxu0
    %v1192 = vadd.f32 0.0, %v1191
    %v1193 = vpop.f32.mrf.mxu0
    %1194 = vdwg.mxu0
    %v1195 = vsel %vm215, %v1189, 0.0
    %v1196 = vrot.slane %v1195, 4
    %v1197 = vadd.f32 %v1195, %v1196
    %v1198 = vrot.slane %v1197, 2
    %v1199 = vadd.f32 %v1197, %v1198
    %v1200 = vrot.slane %v1199, 1
    %v1201 = vadd.f32 %v1199, %v1200
    %v1202 = vsel %vm215, %v1192, 0.0
    %v1203 = vrot.slane %v1202, 4
    %v1204 = vadd.f32 %v1202, %v1203
    %v1205 = vrot.slane %v1204, 2
    %v1206 = vadd.f32 %v1204, %v1205
    %v1207 = vrot.slane %v1206, 1
    %v1208 = vadd.f32 %v1206, %v1207
    %v1209 = vmul.f32 %v1201, 0.16666667
    %v1210 = vmul.f32 %v1208, 0.16666667
    %v1211 = vld [vmem:[%s7] sm:$0xff]
    %v1212 = vld [vmem:[%s7 + $0x8] sm:$0xff]
    %1213 = vset.pattern.permute.xlu0 0
    %1214 = vperm.xlu0 %1213, %v1211
    %v1215 = vpop.permute.xlu0 %1214
    %1216 = vset.pattern.permute.xlu0 0
    %1217 = vperm.xlu0 %1216, %v1212
    %v1218 = vpop.permute.xlu0 %1217
    %vm1219 = vcmp.eq.s32.totalorder %v1215, %v120
    %vm1220 = vcmp.eq.s32.totalorder %v1218, %v120
    %v1221 = vsel %vm1219, 1.0, 0.0
    %v1222 = vsel %vm1220, 1.0, 0.0
    %v1223 = vpack.c.bf16 %v1222, %v1221
    %v1225 = vsel %vm803, %v1223, 0
    %1227 = vmatprep.subr.bf16.mxu0 0
    %1228 = vmatpush1.bf16.msra.mxu0 0
    %1229 = vmatprep.subr.bf16.mxu0 0
    %1230 = vmatpush1.bf16.msra.mxu0 0
    %1231 = vmatprep.subr.bf16.mxu0 0
    %1232 = vmatpush1.bf16.msra.mxu0 0
    %1233 = vmatprep.subr.bf16.mxu0 0
    %1234 = vmatpush1.bf16.msra.mxu0 0
    %1235 = vmatprep.subr.bf16.mxu0 0
    %1236 = vmatpush1.bf16.msra.mxu0 0
    %1237 = vmatprep.subr.bf16.mxu0 0
    %1238 = vmatpush1.bf16.msra.mxu0 0
    %1239 = vmatprep.subr.bf16.mxu0 0
    %1240 = vmatpush1.bf16.msra.mxu0 0
    %1241 = vmatprep.subr.bf16.mxu0 0
    %1242 = vmatpush1.bf16.msra.mxu0 %v801
    %1243 = vmatprep.subr.bf16.mxu0 0
    %1244 = vmatpush2.bf16.msra.mxu0 0
    %1245 = vmatprep.subr.bf16.mxu0 0
    %1246 = vmatpush2.bf16.msra.mxu0 0
    %1247 = vmatprep.subr.bf16.mxu0 0
    %1248 = vmatpush2.bf16.msra.mxu0 0
    %1249 = vmatprep.subr.bf16.mxu0 0
    %1250 = vmatpush2.bf16.msra.mxu0 0
    %1251 = vmatprep.subr.bf16.mxu0 0
    %1252 = vmatpush2.bf16.msra.mxu0 0
    %1253 = vmatprep.subr.bf16.mxu0 0
    %1254 = vmatpush2.bf16.msra.mxu0 0
    %1255 = vmatprep.subr.bf16.mxu0 0
    %1256 = vmatpush2.bf16.msra.mxu0 0
    %1257 = vmatprep.subr.bf16.mxu0 0
    %1258 = vmatpush2.bf16.msra.mxu0 0
    %1259 = vmatprep.mubr.bf16.mxu0 0
    %1260 = vmatmul.mubr.bf16.gmra.mxu0 %v1225
    %v1261 = vpop.f32.mrf.mxu0
    %v1262 = vadd.f32 0.0, %v1261
    %v1263 = vpop.f32.mrf.mxu0
    %v1264 = vpop.f32.mrf.mxu0
    %v1265 = vadd.f32 0.0, %v1264
    %v1266 = vpop.f32.mrf.mxu0
    %1267 = vdwg.mxu0
    %v1268 = vsel %vm215, %v1262, 0.0
    %v1269 = vrot.slane %v1268, 4
    %v1270 = vadd.f32 %v1268, %v1269
    %v1271 = vrot.slane %v1270, 2
    %v1272 = vadd.f32 %v1270, %v1271
    %v1273 = vrot.slane %v1272, 1
    %v1274 = vadd.f32 %v1272, %v1273
    %v1275 = vsel %vm215, %v1265, 0.0
    %v1276 = vrot.slane %v1275, 4
    %v1277 = vadd.f32 %v1275, %v1276
    %v1278 = vrot.slane %v1277, 2
    %v1279 = vadd.f32 %v1277, %v1278
    %v1280 = vrot.slane %v1279, 1
    %v1281 = vadd.f32 %v1279, %v1280
    %v1282 = vmul.f32 %v1274, 0.2
    %v1283 = vmul.f32 %v1281, 0.2
    %v1284 = vpack.c.bf16 %v1209, %v1209
    %v1285 = vpack.c.bf16 %v1210, %v1210
    %v1286 = vpack.c.bf16 %v1282, %v1282
    %v1287 = vpack.c.bf16 %v1283, %v1283
    %v1290 = vunpack.c.l.b16 %v1286
    %v1291 = vunpack.c.l.b16 %v1287
    %v1292 = vsel %vm253, %v1291, %v1290
    %v1293 = vpack.c.b16 %v1292, %v1292
    %v1295 = vsel %vm215, %v1293, 0
    %1297 = vmatprep.subr.bf16.mxu0 0
    %1298 = vmatpush1.bf16.msra.mxu0 0
    %1299 = vmatprep.subr.bf16.mxu0 0
    %1300 = vmatpush1.bf16.msra.mxu0 0
    %1301 = vmatprep.subr.bf16.mxu0 0
    %1302 = vmatpush1.bf16.msra.mxu0 0
    %1303 = vmatprep.subr.bf16.mxu0 0
    %1304 = vmatpush1.bf16.msra.mxu0 0
    %1305 = vmatprep.subr.bf16.mxu0 0
    %1306 = vmatpush1.bf16.msra.mxu0 0
    %1307 = vmatprep.subr.bf16.mxu0 0
    %1308 = vmatpush1.bf16.msra.mxu0 0
    %1309 = vmatprep.subr.bf16.mxu0 0
    %1310 = vmatpush1.bf16.msra.mxu0 %v920
    %1311 = vmatprep.subr.bf16.mxu0 0
    %1312 = vmatpush1.bf16.msra.mxu0 %v919
    %1313 = vmatprep.subr.bf16.mxu0 0
    %1314 = vmatpush2.bf16.msra.mxu0 0
    %1315 = vmatprep.subr.bf16.mxu0 0
    %1316 = vmatpush2.bf16.msra.mxu0 0
    %1317 = vmatprep.subr.bf16.mxu0 0
    %1318 = vmatpush2.bf16.msra.mxu0 0
    %1319 = vmatprep.subr.bf16.mxu0 0
    %1320 = vmatpush2.bf16.msra.mxu0 0
    %1321 = vmatprep.subr.bf16.mxu0 0
    %1322 = vmatpush2.bf16.msra.mxu0 0
    %1323 = vmatprep.subr.bf16.mxu0 0
    %1324 = vmatpush2.bf16.msra.mxu0 0
    %1325 = vmatprep.subr.bf16.mxu0 0
    %1326 = vmatpush2.bf16.msra.mxu0 0
    %1327 = vmatprep.subr.bf16.mxu0 0
    %1328 = vmatpush2.bf16.msra.mxu0 0
    %1329 = vmatprep.mubr.bf16.mxu0 0
    %1330 = vmatmul.mubr.bf16.gmra.mxu0 %v1295
    %v1331 = vpop.f32.mrf.mxu0
    %v1332 = vadd.f32 0.0, %v1331
    %v1333 = vpop.f32.mrf.mxu0
    %v1334 = vpop.f32.mrf.mxu0
    %v1335 = vpop.f32.mrf.mxu0
    %1336 = vdwg.mxu0
    %v1339 = vunpack.c.l.b16 %v1284
    %v1340 = vunpack.c.l.b16 %v1285
    %v1341 = vsel %vm253, %v1340, %v1339
    %v1342 = vpack.c.b16 %v1341, %v1341
    %v1344 = vsel %vm215, %v1342, 0
    %1346 = vmatprep.subr.bf16.mxu0 0
    %1347 = vmatpush1.bf16.msra.mxu0 0
    %1348 = vmatprep.subr.bf16.mxu0 0
    %1349 = vmatpush1.bf16.msra.mxu0 0
    %1350 = vmatprep.subr.bf16.mxu0 0
    %1351 = vmatpush1.bf16.msra.mxu0 0
    %1352 = vmatprep.subr.bf16.mxu0 0
    %1353 = vmatpush1.bf16.msra.mxu0 0
    %1354 = vmatprep.subr.bf16.mxu0 0
    %1355 = vmatpush1.bf16.msra.mxu0 0
    %1356 = vmatprep.subr.bf16.mxu0 0
    %1357 = vmatpush1.bf16.msra.mxu0 0
    %1358 = vmatprep.subr.bf16.mxu0 0
    %1359 = vmatpush1.bf16.msra.mxu0 %v987
    %1360 = vmatprep.subr.bf16.mxu0 0
    %1361 = vmatpush1.bf16.msra.mxu0 %v986
    %1362 = vmatprep.subr.bf16.mxu0 0
    %1363 = vmatpush2.bf16.msra.mxu0 0
    %1364 = vmatprep.subr.bf16.mxu0 0
    %1365 = vmatpush2.bf16.msra.mxu0 0
    %1366 = vmatprep.subr.bf16.mxu0 0
    %1367 = vmatpush2.bf16.msra.mxu0 0
    %1368 = vmatprep.subr.bf16.mxu0 0
    %1369 = vmatpush2.bf16.msra.mxu0 0
    %1370 = vmatprep.subr.bf16.mxu0 0
    %1371 = vmatpush2.bf16.msra.mxu0 0
    %1372 = vmatprep.subr.bf16.mxu0 0
    %1373 = vmatpush2.bf16.msra.mxu0 0
    %1374 = vmatprep.subr.bf16.mxu0 0
    %1375 = vmatpush2.bf16.msra.mxu0 0
    %1376 = vmatprep.subr.bf16.mxu0 0
    %1377 = vmatpush2.bf16.msra.mxu0 0
    %1378 = vmatprep.mubr.bf16.mxu0 0
    %1379 = vmatmul.mubr.bf16.gmra.mxu0 %v1344
    %v1380 = vpop.f32.mrf.mxu0
    %v1381 = vadd.f32 %v1332, %v1380
    %v1382 = vpop.f32.mrf.mxu0
    %v1383 = vpop.f32.mrf.mxu0
    %v1384 = vpop.f32.mrf.mxu0
    %1385 = vdwg.mxu0
    %1386 = vmatprep.subr.bf16.mxu0 0
    %1387 = vmatpush1.bf16.msra.mxu0 0
    %1388 = vmatprep.subr.bf16.mxu0 0
    %1389 = vmatpush1.bf16.msra.mxu0 0
    %1390 = vmatprep.subr.bf16.mxu0 0
    %1391 = vmatpush1.bf16.msra.mxu0 0
    %1392 = vmatprep.subr.bf16.mxu0 0
    %1393 = vmatpush1.bf16.msra.mxu0 0
    %1394 = vmatprep.subr.bf16.mxu0 0
    %1395 = vmatpush1.bf16.msra.mxu0 0
    %1396 = vmatprep.subr.bf16.mxu0 0
    %1397 = vmatpush1.bf16.msra.mxu0 0
    %1398 = vmatprep.subr.bf16.mxu0 0
    %1399 = vmatpush1.bf16.msra.mxu0 %v1042
    %1400 = vmatprep.subr.bf16.mxu0 0
    %1401 = vmatpush1.bf16.msra.mxu0 %v1041
    %1402 = vmatprep.subr.bf16.mxu0 0
    %1403 = vmatpush2.bf16.msra.mxu0 0
    %1404 = vmatprep.subr.bf16.mxu0 0
    %1405 = vmatpush2.bf16.msra.mxu0 0
    %1406 = vmatprep.subr.bf16.mxu0 0
    %1407 = vmatpush2.bf16.msra.mxu0 0
    %1408 = vmatprep.subr.bf16.mxu0 0
    %1409 = vmatpush2.bf16.msra.mxu0 0
    %1410 = vmatprep.subr.bf16.mxu0 0
    %1411 = vmatpush2.bf16.msra.mxu0 0
    %1412 = vmatprep.subr.bf16.mxu0 0
    %1413 = vmatpush2.bf16.msra.mxu0 0
    %1414 = vmatprep.subr.bf16.mxu0 0
    %1415 = vmatpush2.bf16.msra.mxu0 0
    %1416 = vmatprep.subr.bf16.mxu0 0
    %1417 = vmatpush2.bf16.msra.mxu0 0
    %1418 = vmatprep.mubr.bf16.mxu0 0
    %1419 = vmatmul.mubr.bf16.gmra.mxu0 %v550
    %v1420 = vpop.f32.mrf.mxu0
    %v1421 = vadd.f32 0.0, %v1420
    %v1422 = vpop.f32.mrf.mxu0
    %v1423 = vpop.f32.mrf.mxu0
    %v1424 = vpop.f32.mrf.mxu0
    %1425 = vdwg.mxu0
    %v1426 = vadd.f32 %v1381, %v1421
    %v1427 = vadd.f32 %v1426, %v1090
    %v1428 = vtanh.pop %v1427
    %v1429 = vpack.c.bf16 %v1428, %v1428
    %v1431 = vsel %vm215, %v1429, 0
    %1433 = vmatprep.subr.bf16.mxu0 0
    %1434 = vmatpush1.bf16.msra.mxu0 0
    %1435 = vmatprep.subr.bf16.mxu0 0
    %1436 = vmatpush1.bf16.msra.mxu0 0
    %1437 = vmatprep.subr.bf16.mxu0 0
    %1438 = vmatpush1.bf16.msra.mxu0 0
    %1439 = vmatprep.subr.bf16.mxu0 0
    %1440 = vmatpush1.bf16.msra.mxu0 0
    %1441 = vmatprep.subr.bf16.mxu0 0
    %1442 = vmatpush1.bf16.msra.mxu0 0
    %1443 = vmatprep.subr.bf16.mxu0 0
    %1444 = vmatpush1.bf16.msra.mxu0 0
    %1445 = vmatprep.subr.bf16.mxu0 0
    %1446 = vmatpush1.bf16.msra.mxu0 %v546
    %1447 = vmatprep.subr.bf16.mxu0 0
    %1448 = vmatpush1.bf16.msra.mxu0 %v545
    %1449 = vmatprep.subr.bf16.mxu0 0
    %1450 = vmatpush2.bf16.msra.mxu0 0
    %1451 = vmatprep.subr.bf16.mxu0 0
    %1452 = vmatpush2.bf16.msra.mxu0 0
    %1453 = vmatprep.subr.bf16.mxu0 0
    %1454 = vmatpush2.bf16.msra.mxu0 0
    %1455 = vmatprep.subr.bf16.mxu0 0
    %1456 = vmatpush2.bf16.msra.mxu0 0
    %1457 = vmatprep.subr.bf16.mxu0 0
    %1458 = vmatpush2.bf16.msra.mxu0 0
    %1459 = vmatprep.subr.bf16.mxu0 0
    %1460 = vmatpush2.bf16.msra.mxu0 0
    %1461 = vmatprep.subr.bf16.mxu0 0
    %1462 = vmatpush2.bf16.msra.mxu0 0
    %1463 = vmatprep.subr.bf16.mxu0 0
    %1464 = vmatpush2.bf16.msra.mxu0 0
    %1465 = vmatprep.mubr.bf16.mxu0 0
    %1466 = vmatmul.mubr.bf16.gmra.mxu0 %v1431
    %v1467 = vpop.f32.mrf.mxu0
    %v1468 = vadd.f32 %v535, %v1467
    %v1469 = vpop.f32.mrf.mxu0
    %v1470 = vpop.f32.mrf.mxu0
    %v1471 = vpop.f32.mrf.mxu0
    %1472 = vdwg.mxu0
    %v1473 = vpack.c.bf16 %v1468, %v1468
    %v1475 = vsel %vm215, %v1473, 0
    %1477 = vmatprep.subr.bf16.mxu0 0
    %1478 = vmatpush1.bf16.xpose.msra.mxu0 0
    %1479 = vmatprep.subr.bf16.mxu0 0
    %1480 = vmatpush1.bf16.xpose.msra.mxu0 0
    %1481 = vmatprep.subr.bf16.mxu0 0
    %1482 = vmatpush1.bf16.xpose.msra.mxu0 0
    %1483 = vmatprep.subr.bf16.mxu0 0
    %1484 = vmatpush1.bf16.xpose.msra.mxu0 0
    %1485 = vmatprep.subr.bf16.mxu0 0
    %1486 = vmatpush1.bf16.xpose.msra.mxu0 0
    %1487 = vmatprep.subr.bf16.mxu0 0
    %1488 = vmatpush1.bf16.xpose.msra.mxu0 0
    %1489 = vmatprep.subr.bf16.mxu0 0
    %1490 = vmatpush1.bf16.xpose.msra.mxu0 0
    %1491 = vmatprep.subr.bf16.mxu0 0
    %1492 = vmatpush1.bf16.xpose.msra.mxu0 %v1096
    %1493 = vmatprep.subr.bf16.mxu0 0
    %1494 = vmatpush2.bf16.xpose.msra.mxu0 0
    %1495 = vmatprep.subr.bf16.mxu0 0
    %1496 = vmatpush2.bf16.xpose.msra.mxu0 0
    %1497 = vmatprep.subr.bf16.mxu0 0
    %1498 = vmatpush2.bf16.xpose.msra.mxu0 0
    %1499 = vmatprep.subr.bf16.mxu0 0
    %1500 = vmatpush2.bf16.xpose.msra.mxu0 0
    %1501 = vmatprep.subr.bf16.mxu0 0
    %1502 = vmatpush2.bf16.xpose.msra.mxu0 0
    %1503 = vmatprep.subr.bf16.mxu0 0
    %1504 = vmatpush2.bf16.xpose.msra.mxu0 0
    %1505 = vmatprep.subr.bf16.mxu0 0
    %1506 = vmatpush2.bf16.xpose.msra.mxu0 0
    %1507 = vmatprep.subr.bf16.mxu0 0
    %1508 = vmatpush2.bf16.xpose.msra.mxu0 0
    %1509 = vmatprep.mubr.bf16.mxu0 0
    %1510 = vmatmul.mubr.bf16.gmra.mxu0 %v1475
    %v1511 = vpop.f32.mrf.mxu0
    %v1512 = vadd.f32 %v598, %v1511
    %v1513 = vpop.f32.mrf.mxu0
    %v1514 = vpop.f32.mrf.mxu0
    %v1515 = vpop.f32.mrf.mxu0
    %1516 = vdwg.mxu0
    %v1517 = vxor.u32 %v641, 2147483648
    %v1518 = vmul.f32 %v1517, 1.442695
    %v1519 = vpow.pop %v1518
    %v1520 = vadd.f32 %v1519, 1.0
    %v1521 = vrcp.pop %v1520
    %v1522 = vmul.f32 1.0, %v1521
    %v1523 = vmul.f32 %v1522, 0.5
    %v1524 = vxor.u32 %v1133, 2147483648
    %v1525 = vmul.f32 %v1524, 1.442695
    %v1526 = vpow.pop %v1525
    %v1527 = vadd.f32 %v1526, 1.0
    %v1528 = vrcp.pop %v1527
    %v1529 = vmul.f32 1.0, %v1528
    %v1530 = vmul.f32 %v1529, 0.5
    %v1531 = vadd.f32 %v1523, %v1530
    %vm1532 = vcmask 25600
    %1533 = vst.msk [vmem:[#allocation2] sm:$0x3] %vm1532, %v1531
    %v1534 = vld [vmem:[%s10] sm:$0x3]
    %v1535 = vmax.f32 %v641, 0.0
    %v1536 = vmul.f32 %v641, %v1534
    %v1537 = vsub.f32 %v1535, %v1536
    %v1538 = vand.u32 2147483647, %v641
    %v1539 = vsub.f32 0.0, %v1538
    %v1540 = vmul.f32 %v1539, 1.442695
    %v1541 = vpow.pop %v1540
    %v1542 = vadd.f32 %v1541, 1.0
    %v1543 = vlog2.pop %v1542
    %v1544 = vmul.f32 %v1543, 0.6931472
    %v1545 = vmul.f32 -0.5, %v1541
    %v1546 = vadd.f32 %v1545, 1.0
    %v1547 = vmul.f32 %v1546, %v1541
    %v1548 = vand.u32 2147483647, %v1541
    %vm1549 = vcmp.lt.f32.partialorder %v1548, 0.0004427343
    %v1550 = vsel %vm1549, %v1547, %v1544
    %v1551 = vadd.f32 %v1537, %v1550
    %v1552 = vsel %vm1532, %v1551, 0.0
    %1553 = vadd.xlane.f32.xlu0 %v1552
    %v1554 = vpop.xlane.xlu0 %1553
    %v1555 = vrot.slane %v1554, 4
    %v1556 = vadd.f32 %v1554, %v1555
    %v1557 = vrot.slane %v1556, 2
    %v1558 = vadd.f32 %v1556, %v1557
    %v1559 = vrot.slane %v1558, 1
    %v1560 = vadd.f32 %v1558, %v1559
    %s1561 = vtos %v1560
    %v1562 = vrcp.pop 8.0
    %s1563 = vtos %v1562
    %s1564 = smul.f32 %s1561, %s1563
    %s1565 = smul.f32 %s1564, 3.0
    %v1566 = vmax.f32 %v1512, 0.0
    %v1567 = vmul.f32 %v1512, %v1534
    %v1568 = vsub.f32 %v1566, %v1567
    %v1569 = vand.u32 2147483647, %v1512
    %v1570 = vsub.f32 0.0, %v1569
    %v1571 = vmul.f32 %v1570, 1.442695
    %v1572 = vpow.pop %v1571
    %v1573 = vadd.f32 %v1572, 1.0
    %v1574 = vlog2.pop %v1573
    %v1575 = vmul.f32 %v1574, 0.6931472
    %v1576 = vmul.f32 -0.5, %v1572
    %v1577 = vadd.f32 %v1576, 1.0
    %v1578 = vmul.f32 %v1577, %v1572
    %v1579 = vand.u32 2147483647, %v1572
    %vm1580 = vcmp.lt.f32.partialorder %v1579, 0.0004427343
    %v1581 = vsel %vm1580, %v1578, %v1575
    %v1582 = vadd.f32 %v1568, %v1581
    %v1583 = vsel %vm1532, %v1582, 0.0
    %1584 = vadd.xlane.f32.xlu0 %v1583
    %v1585 = vpop.xlane.xlu0 %1584
    %v1586 = vrot.slane %v1585, 4
    %v1587 = vadd.f32 %v1585, %v1586
    %v1588 = vrot.slane %v1587, 2
    %v1589 = vadd.f32 %v1587, %v1588
    %v1590 = vrot.slane %v1589, 1
    %v1591 = vadd.f32 %v1589, %v1590
    %s1592 = vtos %v1591
    %v1593 = vrcp.pop 8.0
    %s1594 = vtos %v1593
    %s1595 = smul.f32 %s1592, %s1594
    %s1596 = smul.f32 %s1595, 2.0
    %s1597 = sadd.f32 %s1565, %s1596
    %v1598 = vmax.f32 %v1133, 0.0
    %v1599 = vmul.f32 %v1133, %v1534
    %v1600 = vsub.f32 %v1598, %v1599
    %v1601 = vand.u32 2147483647, %v1133
    %v1602 = vsub.f32 0.0, %v1601
    %v1603 = vmul.f32 %v1602, 1.442695
    %v1604 = vpow.pop %v1603
    %v1605 = vadd.f32 %v1604, 1.0
    %v1606 = vlog2.pop %v1605
    %v1607 = vmul.f32 %v1606, 0.6931472
    %v1608 = vmul.f32 -0.5, %v1604
    %v1609 = vadd.f32 %v1608, 1.0
    %v1610 = vmul.f32 %v1609, %v1604
    %v1611 = vand.u32 2147483647, %v1604
    %vm1612 = vcmp.lt.f32.partialorder %v1611, 0.0004427343
    %v1613 = vsel %vm1612, %v1610, %v1607
    %v1614 = vadd.f32 %v1600, %v1613
    %v1615 = vsel %vm1532, %v1614, 0.0
    %1616 = vadd.xlane.f32.xlu0 %v1615
    %v1617 = vpop.xlane.xlu0 %1616
    %v1618 = vrot.slane %v1617, 4
    %v1619 = vadd.f32 %v1617, %v1618
    %v1620 = vrot.slane %v1619, 2
    %v1621 = vadd.f32 %v1619, %v1620
    %v1622 = vrot.slane %v1621, 1
    %v1623 = vadd.f32 %v1621, %v1622
    %s1624 = vtos %v1623
    %v1625 = vrcp.pop 8.0
    %s1626 = vtos %v1625
    %s1627 = smul.f32 %s1624, %s1626
    %s1628 = smul.f32 %s1627, 3.0
    %s1629 = sadd.f32 %s1597, %s1628
    %s1630 = scalar_lea.smem [#allocation5], 0
    %1631 = sst [smem:[%s1630]] %s1629
    // Predicated region
    $region94: #{lesicin_forward.1} parent=1 // pred_check
      _
    $region95: #{lesicin_forward.1} parent=1 // pred_check_branch
      %1633 = sbr.rel (0) target = $region97
    $region96: #{lesicin_forward.1} parent=1 // pred_region
      %s1635 = ssub.s32 32, 32
      %1636 = vsyncadd [#allocation3], %s1635
      %s1638 = sshll.u32 [#allocation2], 4
      %s1639 = int_to_ptr.vmem [resolvable:$true] %s1638
      %1641 = dma.vmem_to_hbm [thread:$0]  %s1639, 32, %s23, [#allocation3]
    $region97: #{lesicin_forward.1} parent=1 // pred_fallthru
      _
    // Predicated region
    $region98: #{lesicin_forward.1} parent=1 // pred_check
      _
    $region99: #{lesicin_forward.1} parent=1 // pred_check_branch
      %1643 = sbr.rel (0) target = $region101
    $region100: #{lesicin_forward.1} parent=1 // pred_region
      %s1645 = ssub.s32 16, 16
      %1646 = vsyncadd [#allocation4], %s1645
      %1649 = dma.smem_to_hbm [#allocation5], 16, %s24, [#allocation4]
    $region101: #{lesicin_forward.1} parent=1 // pred_fallthru
      _
    // Predicated region
    $region102: #{lesicin_forward.1} parent=1 // pred_check
      _
    $region103: #{lesicin_forward.1} parent=1 // pred_check_branch
      %1651 = sbr.rel (0) target = $region105
    $region104: #{lesicin_forward.1} parent=1 // pred_region
      %1652 = dma.done [#allocation3], 32
    $region105: #{lesicin_forward.1} parent=1 // pred_fallthru
      _
    // Predicated region
    $region106: #{lesicin_forward.1} parent=1 // pred_check
      _
    $region107: #{lesicin_forward.1} parent=1 // pred_check_branch
      %1654 = sbr.rel (0) target = $region109
    $region108: #{lesicin_forward.1} parent=1 // pred_region
      %1655 = dma.done [#allocation4], 16
    $region109: #{lesicin_forward.1} parent=1 // pred_fallthru
      _
    %1656 = sfence
    %1657 = vsyncpa [#allocation3], 1
    %1658 = vsyncpa [#allocation4], 1

</llo_original>
